<compile_context>
chip_gen: v5e
topology: v5e:2x2
jax: 0.10.0
libtpu: 0.0.40
codegen_flags: <defaults>
</compile_context>

<pallas_src>
import functools

import jax
import jax.numpy as jnp
from jax.experimental import pallas as pl
from jax.experimental.pallas import tpu as pltpu

LANE = 128  # TPU lane width: output channels are padded to this for lane-dense I/O.


# ----------------------------------------------------------------------------
# Fused TCN kernel (all TemporalBlocks + head) -- one batch block per grid step
# ----------------------------------------------------------------------------
def make_fused_kernel(T, Cp, k, dilations, has_down, Cin, Bblk):
    M = Bblk * T
    n_layers = len(dilations)

    def kernel(*refs):
        x_ref = refs[0]
        pos = 1
        layer_refs = []
        for hd in has_down:
            n = 6 if hd else 4
            layer_refs.append(refs[pos:pos + n])
            pos += n
        wfc_ref = refs[pos]
        bfc_ref = refs[pos + 1]
        o_ref = refs[pos + 2]
        h_scr = refs[pos + 3]            # (M, Cp) f32 VMEM scratch

        # time index (within each batch element) of every flattened row; (M, 1)
        t_row = jax.lax.broadcasted_iota(jnp.int32, (M, 1), 0) % T

        # real (unpadded) input channels: first layer contracts over Cin directly,
        # so no zero-padding is ever read from HBM.
        h = x_ref[...].reshape(M, Cin)

        def causal_conv(h_in, w_ref, b_ref, d, fmasks):
            # k accumulated (M,C)x(C,Cp) bf16 MXU dots with f32 accumulation.
            acc = jnp.dot(h_in.astype(jnp.bfloat16), w_ref[0],
                          preferred_element_type=jnp.float32)
            for j in range(1, k):
                # tap_j[t] = h_in[t - j*d]; pltpu.roll wraps across batch-element
                # boundaries, which the causal mask (t % T >= j*d) zeros out.
                tap = pltpu.roll(h_in, shift=j * d, axis=0)      # XLU sublane roll
                tap = tap * fmasks[j - 1]                        # causal zero-pad
                acc = acc + jnp.dot(tap.astype(jnp.bfloat16), w_ref[j],
                                    preferred_element_type=jnp.float32)
            return acc + b_ref[...]

        for li in range(n_layers):
            d = dilations[li]
            if has_down[li]:
                w1_ref, b1_ref, w2_ref, b2_ref, wd_ref, bd_ref = layer_refs[li]
            else:
                w1_ref, b1_ref, w2_ref, b2_ref = layer_refs[li]

            # causal masks hoisted: same dilation for both convs of this block.
            fmasks = [(t_row >= (j * d)).astype(jnp.float32) for j in range(1, k)]

            h1 = jnp.maximum(causal_conv(h, w1_ref, b1_ref, d, fmasks), 0.0)
            h2 = jnp.maximum(causal_conv(h1, w2_ref, b2_ref, d, fmasks), 0.0)

            if has_down[li]:
                res = jnp.dot(h.astype(jnp.bfloat16), wd_ref[...],
                              preferred_element_type=jnp.float32) + bd_ref[...]
            elif h.shape[1] == Cp:
                res = h                                          # Cin == Cout (padded)
            else:
                # first layer, no downsample: lane-pad the residual once via scratch.
                h_scr[...] = jnp.zeros((M, Cp), jnp.float32)
                h_scr[:, :h.shape[1]] = h
                res = h_scr[...]
            h = jnp.maximum(h2 + res, 0.0)

        # head: last timestep of each batch element -> Linear -> stable sigmoid.
        h_scr[...] = h                                           # final activations
        last = h_scr[pl.ds(T - 1, Bblk, stride=T), :]            # rows T-1, 2T-1, ...
        z = jnp.dot(last.astype(jnp.bfloat16), wfc_ref[...],
                    preferred_element_type=jnp.float32) + bfc_ref[...]
        e = jnp.exp(-jnp.abs(z))                                 # EUP, never overflows
        sig = jnp.where(z >= 0.0, 1.0 / (1.0 + e), e / (1.0 + e))
        o_ref[...] = sig.reshape(Bblk, 1, Cp)

    return kernel


# ----------------------------------------------------------------------------
# Wrapper helpers: weight padding / layout, VMEM-aware batch blocking
# ----------------------------------------------------------------------------
def _pad_params(layer_params, fc_params, Cp, wdtype):
    """Pad output channels to Cp; keep layer-0 contraction at the real Cin.
    Weights become bf16 slabs of shape (k, C_in_layer, Cp); biases stay f32."""
    padded = []
    for i, p in enumerate(layer_params):
        k, cin, cout = p["w1"].shape
        ci = cin if i == 0 else Cp
        w1 = jnp.zeros((k, ci, Cp), jnp.float32).at[:, :cin, :cout].set(p["w1"])
        w2 = jnp.zeros((k, Cp, Cp), jnp.float32).at[:, :cout, :cout].set(p["w2"])
        q = {
            "w1": w1.astype(wdtype),
            "b1": jnp.zeros((1, Cp), jnp.float32).at[:, :cout].set(p["b1"]),
            "w2": w2.astype(wdtype),
            "b2": jnp.zeros((1, Cp), jnp.float32).at[:, :cout].set(p["b2"]),
        }
        if "wd" in p:
            wd = jnp.zeros((ci, Cp), jnp.float32).at[:cin, :cout].set(p["wd"])
            q["wd"] = wd.astype(wdtype)
            q["bd"] = jnp.zeros((1, Cp), jnp.float32).at[:, :cout].set(p["bd"])
        padded.append(q)
    c_last = fc_params["w"].shape[0]
    wfc = (jnp.zeros((Cp, Cp), jnp.float32)
           .at[:c_last, :1].set(fc_params["w"]).astype(wdtype))
    bfc = jnp.zeros((1, Cp), jnp.float32).at[:, :1].set(fc_params["b"])
    return padded, wfc, bfc


def _choose_bblk(B, T, Cp, Cin, weight_bytes, vmem_cap):
    """Largest divisor of B whose per-step live set fits the VMEM budget.
    Prefer >=2 grid steps only when the per-block matmul M dim stays large
    (DMA/compute overlap + both v7x TensorCores); otherwise keep one step so
    MXU M-occupancy on single-TC chips (v5e/v6e) stays maximal."""
    budget = min(vmem_cap // 2, 40 << 20)
    # live f32 activations (h,h1,h2,acc,res,scratch) + one bf16 tap + input block.
    per_row = Cp * 4 * 6 + Cp * 2 + 2 * Cin * 4 * 2 + 32
    divisors = [d for d in range(1, B + 1) if B % d == 0]
    ok = [d for d in divisors if d * T * per_row + 2 * weight_bytes <= budget]
    bblk = max(ok) if ok else 1
    if bblk == B:
        smaller = [d for d in ok if d < B and d * T >= 512]
        if smaller:
            bblk = max(smaller)
    return bblk


# ----------------------------------------------------------------------------
# Forward pass wrapper
# ----------------------------------------------------------------------------
def tcn_forward(x, layer_params, fc_params, kernel_size):
    """x: (B, T, num_inputs) -> (B, 1).  Matches TCN.forward (eval mode)."""
    B, T, Cin = x.shape
    Cp = LANE
    n_layers = len(layer_params)
    dilations = tuple(2 ** i for i in range(n_layers))
    has_down = tuple("wd" in p for p in layer_params)

    padded, wfc, bfc = _pad_params(layer_params, fc_params, Cp, jnp.bfloat16)

    weight_list = []
    for p in padded:
        for name in ("w1", "b1", "w2", "b2", "wd", "bd"):
            if name in p:
                weight_list.append(p[name])
    weight_list += [wfc, bfc]
    weight_bytes = sum(int(a.size) * a.dtype.itemsize for a in weight_list)

    try:
        vmem_cap = int(pltpu.get_tpu_info().vmem_capacity_bytes)
    except Exception:
        vmem_cap = 64 << 20          # assume the smallest (v7x per-TC) if unknown

    Bblk = _choose_bblk(B, T, Cp, Cin, weight_bytes, vmem_cap)
    nb = B // Bblk

    # input keeps its real channel count -- no HBM traffic for padding lanes.
    in_specs = [pl.BlockSpec((Bblk, T, Cin), lambda b: (b, 0, 0))]
    for arr in weight_list:
        in_specs.append(pl.BlockSpec(arr.shape, lambda b, _n=arr.ndim: (0,) * _n))
    args = [x.astype(jnp.float32)] + weight_list

    # advisory cost estimate (actual kernel MACs, real Cin for the first layer).
    M = B * T
    flops = 0
    for li in range(n_layers):
        ci = Cin if li == 0 else Cp
        flops += 2 * M * kernel_size * ci * Cp          # conv1
        flops += 2 * M * kernel_size * Cp * Cp          # conv2
        if has_down[li]:
            flops += 2 * M * ci * Cp                    # 1x1 downsample
    flops += 2 * B * Cp * Cp                            # head
    bytes_accessed = int(x.size) * 4 + weight_bytes + B * Cp * 4
    cost = pl.CostEstimate(flops=int(flops), transcendentals=int(B * Cp),
                           bytes_accessed=int(bytes_accessed))

    kernel = make_fused_kernel(T, Cp, kernel_size, dilations, has_down, Cin, Bblk)

    out = pl.pallas_call(
        kernel,
        out_shape=jax.ShapeDtypeStruct((B, 1, Cp), jnp.float32),
        grid=(nb,),
        in_specs=in_specs,
        out_specs=pl.BlockSpec((Bblk, 1, Cp), lambda b: (b, 0, 0)),
        scratch_shapes=[pltpu.VMEM((Bblk * T, Cp), jnp.float32)],
        compiler_params=pltpu.CompilerParams(
            # "parallel" lets megacore shard the batch axis; weights have constant
            # index_maps so they are fetched once regardless of nb.
            dimension_semantics=("parallel",),
            vmem_limit_bytes=int(min(vmem_cap * 3 // 4, 96 << 20)),
        ),
        cost_estimate=cost,
    )(*args)
    return out[:, 0, :1]                                  # (B, 1)


# ----------------------------------------------------------------------------
# Deterministic parameter init (PyTorch-like uniform(-1/sqrt(fan_in), ...))
# conv weights stored as (k, Cin, Cout); tap j multiplies x[t - j*d].
# ----------------------------------------------------------------------------
def init_params(key, num_inputs, num_channels, kernel_size):
    layer_params = []
    for i, c_out in enumerate(num_channels):
        c_in = num_inputs if i == 0 else num_channels[i - 1]
        key, k1, k2, k3, k4, k5, k6 = jax.random.split(key, 7)
        bound1 = 1.0 / (c_in * kernel_size) ** 0.5
        bound2 = 1.0 / (c_out * kernel_size) ** 0.5
        p = {
            "w1": jax.random.uniform(k1, (kernel_size, c_in, c_out),
                                     jnp.float32, -bound1, bound1),
            "b1": jax.random.uniform(k2, (1, c_out), jnp.float32, -bound1, bound1),
            "w2": jax.random.uniform(k3, (kernel_size, c_out, c_out),
                                     jnp.float32, -bound2, bound2),
            "b2": jax.random.uniform(k4, (1, c_out), jnp.float32, -bound2, bound2),
        }
        if c_in != c_out:
            boundd = 1.0 / c_in ** 0.5
            p["wd"] = jax.random.uniform(k5, (c_in, c_out), jnp.float32,
                                         -boundd, boundd)
            p["bd"] = jax.random.uniform(k6, (1, c_out), jnp.float32,
                                         -boundd, boundd)
        layer_params.append(p)

    key, k1, k2 = jax.random.split(key, 3)
    c_last = num_channels[-1]
    boundf = 1.0 / c_last ** 0.5
    fc_params = {
        "w": jax.random.uniform(k1, (c_last, 1), jnp.float32, -boundf, boundf),
        "b": jax.random.uniform(k2, (1, 1), jnp.float32, -boundf, boundf),
    }
    return layer_params, fc_params


# ----------------------------------------------------------------------------
# Pure-JAX f32 reference (same math, no Pallas) for a correctness sanity check
# ----------------------------------------------------------------------------
def ref_forward(x, layer_params, fc_params, kernel_size):
    y = x
    for i, p in enumerate(layer_params):
        d = 2 ** i

        def causal_conv(inp, w, b):
            T = inp.shape[1]
            acc = jnp.zeros((inp.shape[0], T, w.shape[2]), jnp.float32) + b
            for j in range(kernel_size):
                shifted = jnp.pad(inp, ((0, 0), (j * d, 0), (0, 0)))[:, :T, :]
                acc = acc + jnp.einsum("btc,cd->btd", shifted, w[j])
            return acc

        h1 = jax.nn.relu(causal_conv(y, p["w1"], p["b1"]))
        h2 = jax.nn.relu(causal_conv(h1, p["w2"], p["b2"]))
        if "wd" in p:
            res = jnp.einsum("btc,cd->btd", y, p["wd"]) + p["bd"]
        else:
            res = y
        y = jax.nn.relu(h2 + res)
    z = y[:, -1, :] @ fc_params["w"] + fc_params["b"]
    return jax.nn.sigmoid(z)


# ----------------------------------------------------------------------------
if __name__ == "__main__":
    B, T = 2, 16
    num_inputs = 4
    num_channels = [8, 16, 16]
    kernel_size = 2

    key = jax.random.PRNGKey(0)
    key, pkey, xkey = jax.random.split(key, 3)
    layer_params, fc_params = init_params(pkey, num_inputs, num_channels,
                                          kernel_size)

    # Module input convention: (batch, time, features); forward transposes to NCT.
    x = jax.random.normal(xkey, (B, T, num_inputs), jnp.float32)

    fwd = functools.partial(tcn_forward, layer_params=layer_params,
                            fc_params=fc_params, kernel_size=kernel_size)
    out = jax.jit(fwd)(x)
    out = jax.block_until_ready(out)

    ref = ref_forward(x, layer_params, fc_params, kernel_size)
    assert out.shape == (B, 1), out.shape
    # bf16 MXU operands with f32 accumulation vs. the pure-f32 reference.
    err = float(jnp.max(jnp.abs(out - ref)))
    assert err < 2e-2, (err, out, ref)

    print("KERNEL_OK")
</pallas_src>

<mosaic_0001>
module attributes {stable_mosaic.version = 11 : i64} {
  func.func @kernel(%arg0: i32, %arg1: memref<2x16x4xf32, #tpu.memory_space<vmem>>, %arg2: memref<2x4x128xbf16, #tpu.memory_space<vmem>>, %arg3: memref<1x128xf32, #tpu.memory_space<vmem>>, %arg4: memref<2x128x128xbf16, #tpu.memory_space<vmem>>, %arg5: memref<1x128xf32, #tpu.memory_space<vmem>>, %arg6: memref<4x128xbf16, #tpu.memory_space<vmem>>, %arg7: memref<1x128xf32, #tpu.memory_space<vmem>>, %arg8: memref<2x128x128xbf16, #tpu.memory_space<vmem>>, %arg9: memref<1x128xf32, #tpu.memory_space<vmem>>, %arg10: memref<2x128x128xbf16, #tpu.memory_space<vmem>>, %arg11: memref<1x128xf32, #tpu.memory_space<vmem>>, %arg12: memref<128x128xbf16, #tpu.memory_space<vmem>>, %arg13: memref<1x128xf32, #tpu.memory_space<vmem>>, %arg14: memref<2x128x128xbf16, #tpu.memory_space<vmem>>, %arg15: memref<1x128xf32, #tpu.memory_space<vmem>>, %arg16: memref<2x128x128xbf16, #tpu.memory_space<vmem>>, %arg17: memref<1x128xf32, #tpu.memory_space<vmem>>, %arg18: memref<128x128xbf16, #tpu.memory_space<vmem>>, %arg19: memref<1x128xf32, #tpu.memory_space<vmem>>, %arg20: memref<2x1x128xf32, #tpu.memory_space<vmem>>, %arg21: memref<32x128xf32, #tpu.memory_space<vmem>>) attributes {dimension_semantics = [#tpu.dimension_semantics<parallel>], iteration_bounds = array<i64: 1>, scalar_prefetch = 0 : i64, scratch_operands = 1 : i64, tpu.core_type = #tpu.core_type<tc>, window_params = [{transform_indices = @transform_0, window_bounds = array<i64: 2, 16, 4>}, {pipeline_mode = #tpu.pipeline_mode<synchronous>, transform_indices = @transform_1, window_bounds = array<i64: 2, 4, 128>}, {pipeline_mode = #tpu.pipeline_mode<synchronous>, transform_indices = @transform_2, window_bounds = array<i64: 1, 128>}, {pipeline_mode = #tpu.pipeline_mode<synchronous>, transform_indices = @transform_3, window_bounds = array<i64: 2, 128, 128>}, {pipeline_mode = #tpu.pipeline_mode<synchronous>, transform_indices = @transform_4, window_bounds = array<i64: 1, 128>}, {pipeline_mode = #tpu.pipeline_mode<synchronous>, transform_indices = @transform_5, window_bounds = array<i64: 4, 128>}, {pipeline_mode = #tpu.pipeline_mode<synchronous>, transform_indices = @transform_6, window_bounds = array<i64: 1, 128>}, {pipeline_mode = #tpu.pipeline_mode<synchronous>, transform_indices = @transform_7, window_bounds = array<i64: 2, 128, 128>}, {pipeline_mode = #tpu.pipeline_mode<synchronous>, transform_indices = @transform_8, window_bounds = array<i64: 1, 128>}, {pipeline_mode = #tpu.pipeline_mode<synchronous>, transform_indices = @transform_9, window_bounds = array<i64: 2, 128, 128>}, {pipeline_mode = #tpu.pipeline_mode<synchronous>, transform_indices = @transform_10, window_bounds = array<i64: 1, 128>}, {pipeline_mode = #tpu.pipeline_mode<synchronous>, transform_indices = @transform_11, window_bounds = array<i64: 128, 128>}, {pipeline_mode = #tpu.pipeline_mode<synchronous>, transform_indices = @transform_12, window_bounds = array<i64: 1, 128>}, {pipeline_mode = #tpu.pipeline_mode<synchronous>, transform_indices = @transform_13, window_bounds = array<i64: 2, 128, 128>}, {pipeline_mode = #tpu.pipeline_mode<synchronous>, transform_indices = @transform_14, window_bounds = array<i64: 1, 128>}, {pipeline_mode = #tpu.pipeline_mode<synchronous>, transform_indices = @transform_15, window_bounds = array<i64: 2, 128, 128>}, {pipeline_mode = #tpu.pipeline_mode<synchronous>, transform_indices = @transform_16, window_bounds = array<i64: 1, 128>}, {pipeline_mode = #tpu.pipeline_mode<synchronous>, transform_indices = @transform_17, window_bounds = array<i64: 128, 128>}, {pipeline_mode = #tpu.pipeline_mode<synchronous>, transform_indices = @transform_18, window_bounds = array<i64: 1, 128>}, {transform_indices = @transform_19, window_bounds = array<i64: 2, 1, 128>}]} {
    %0 = tpu.iota {dimensions = array<i32: 0>} : vector<32x1xi32>
    %c16_i32 = arith.constant 16 : i32
    %c0_i32 = arith.constant 0 : i32
    %1 = arith.cmpi eq, %c16_i32, %c0_i32 : i32
    %c1_i32 = arith.constant 1 : i32
    %2 = arith.select %1, %c1_i32, %c16_i32 : i32
    %3 = vector.broadcast %2 : i32 to vector<32x1xi32>
    %4 = arith.remsi %0, %3 : vector<32x1xi32>
    %c0_i32_0 = arith.constant 0 : i32
    %5 = vector.broadcast %c0_i32_0 : i32 to vector<32x1xi32>
    %6 = arith.cmpi ne, %4, %5 : vector<32x1xi32>
    %c0_i32_1 = arith.constant 0 : i32
    %7 = vector.broadcast %c0_i32_1 : i32 to vector<32x1xi32>
    %8 = arith.cmpi slt, %4, %7 : vector<32x1xi32>
    %c0_i32_2 = arith.constant 0 : i32
    %9 = arith.cmpi slt, %2, %c0_i32_2 : i32
    %10 = vector.broadcast %9 : i1 to vector<32x1xi1>
    %11 = vector.broadcast %10 : vector<32x1xi1> to vector<32x1xi1>
    %12 = arith.xori %8, %11 : vector<32x1xi1>
    %13 = arith.andi %12, %6 : vector<32x1xi1>
    %14 = vector.broadcast %2 : i32 to vector<32x1xi32>
    %15 = arith.addi %4, %14 : vector<32x1xi32>
    %16 = arith.select %13, %15, %4 : vector<32x1xi1>, vector<32x1xi32>
    %c0 = arith.constant 0 : index
    %c0_3 = arith.constant 0 : index
    %c0_4 = arith.constant 0 : index
    %17 = vector.load %arg1[%c0, %c0_3, %c0_4] : memref<2x16x4xf32, #tpu.memory_space<vmem>>, vector<2x16x4xf32>
    %18 = vector.shape_cast %17 : vector<2x16x4xf32> to vector<32x4xf32>
    %c1_i32_5 = arith.constant 1 : i32
    %19 = vector.broadcast %c1_i32_5 : i32 to vector<32x1xi32>
    %20 = arith.cmpi sge, %16, %19 : vector<32x1xi32>
    %21 = arith.extui %20 : vector<32x1xi1> to vector<32x1xi32>
    %22 = arith.sitofp %21 : vector<32x1xi32> to vector<32x1xf32>
    %23 = arith.truncf %18 : vector<32x4xf32> to vector<32x4xbf16>
    %c0_6 = arith.constant 0 : index
    %c0_7 = arith.constant 0 : index
    %c0_8 = arith.constant 0 : index
    %24 = vector.load %arg2[%c0_6, %c0_7, %c0_8] : memref<2x4x128xbf16, #tpu.memory_space<vmem>>, vector<1x4x128xbf16>
    %25 = vector.shape_cast %24 : vector<1x4x128xbf16> to vector<4x128xbf16>
    %cst = arith.constant dense<0.000000e+00> : vector<32x128xf32>
    %26 = tpu.matmul %23, %25, %cst {dimension_numbers = #tpu.dot_dimension_numbers<[1], [0], [0], [1], [0, 0, 1, 1], [], []>} : vector<32x4xbf16>, vector<4x128xbf16>, vector<32x128xf32> -> vector<32x128xf32>
    %c1_i32_9 = arith.constant 1 : i32
    %27 = tpu.dynamic_rotate %18 by %c1_i32_9 dim 0 : vector<32x4xf32>, i32 -> vector<32x4xf32>
    %28 = vector.broadcast %22 : vector<32x1xf32> to vector<32x4xf32>
    %29 = arith.mulf %27, %28 : vector<32x4xf32>
    %30 = arith.truncf %29 : vector<32x4xf32> to vector<32x4xbf16>
    %c1 = arith.constant 1 : index
    %c0_10 = arith.constant 0 : index
    %c0_11 = arith.constant 0 : index
    %31 = vector.load %arg2[%c1, %c0_10, %c0_11] : memref<2x4x128xbf16, #tpu.memory_space<vmem>>, vector<1x4x128xbf16>
    %32 = vector.shape_cast %31 : vector<1x4x128xbf16> to vector<4x128xbf16>
    %cst_12 = arith.constant dense<0.000000e+00> : vector<32x128xf32>
    %33 = tpu.matmul %30, %32, %cst_12 {dimension_numbers = #tpu.dot_dimension_numbers<[1], [0], [0], [1], [0, 0, 1, 1], [], []>} : vector<32x4xbf16>, vector<4x128xbf16>, vector<32x128xf32> -> vector<32x128xf32>
    %34 = arith.addf %26, %33 : vector<32x128xf32>
    %c0_13 = arith.constant 0 : index
    %c0_14 = arith.constant 0 : index
    %35 = vector.load %arg3[%c0_13, %c0_14] : memref<1x128xf32, #tpu.memory_space<vmem>>, vector<1x128xf32>
    %36 = vector.broadcast %35 : vector<1x128xf32> to vector<32x128xf32>
    %37 = arith.addf %34, %36 : vector<32x128xf32>
    %cst_15 = arith.constant 0.000000e+00 : f32
    %38 = vector.broadcast %cst_15 : f32 to vector<32x128xf32>
    %39 = arith.maximumf %37, %38 : vector<32x128xf32>
    %40 = arith.truncf %39 : vector<32x128xf32> to vector<32x128xbf16>
    %c0_16 = arith.constant 0 : index
    %c0_17 = arith.constant 0 : index
    %c0_18 = arith.constant 0 : index
    %41 = vector.load %arg4[%c0_16, %c0_17, %c0_18] : memref<2x128x128xbf16, #tpu.memory_space<vmem>>, vector<1x128x128xbf16>
    %42 = vector.shape_cast %41 : vector<1x128x128xbf16> to vector<128x128xbf16>
    %cst_19 = arith.constant dense<0.000000e+00> : vector<32x128xf32>
    %43 = tpu.matmul %40, %42, %cst_19 {dimension_numbers = #tpu.dot_dimension_numbers<[1], [0], [0], [1], [0, 0, 1, 1], [], []>} : vector<32x128xbf16>, vector<128x128xbf16>, vector<32x128xf32> -> vector<32x128xf32>
    %c1_i32_20 = arith.constant 1 : i32
    %44 = tpu.dynamic_rotate %39 by %c1_i32_20 dim 0 : vector<32x128xf32>, i32 -> vector<32x128xf32>
    %45 = vector.broadcast %22 : vector<32x1xf32> to vector<32x128xf32>
    %46 = arith.mulf %44, %45 : vector<32x128xf32>
    %47 = arith.truncf %46 : vector<32x128xf32> to vector<32x128xbf16>
    %c1_21 = arith.constant 1 : index
    %c0_22 = arith.constant 0 : index
    %c0_23 = arith.constant 0 : index
    %48 = vector.load %arg4[%c1_21, %c0_22, %c0_23] : memref<2x128x128xbf16, #tpu.memory_space<vmem>>, vector<1x128x128xbf16>
    %49 = vector.shape_cast %48 : vector<1x128x128xbf16> to vector<128x128xbf16>
    %cst_24 = arith.constant dense<0.000000e+00> : vector<32x128xf32>
    %50 = tpu.matmul %47, %49, %cst_24 {dimension_numbers = #tpu.dot_dimension_numbers<[1], [0], [0], [1], [0, 0, 1, 1], [], []>} : vector<32x128xbf16>, vector<128x128xbf16>, vector<32x128xf32> -> vector<32x128xf32>
    %51 = arith.addf %43, %50 : vector<32x128xf32>
    %c0_25 = arith.constant 0 : index
    %c0_26 = arith.constant 0 : index
    %52 = vector.load %arg5[%c0_25, %c0_26] : memref<1x128xf32, #tpu.memory_space<vmem>>, vector<1x128xf32>
    %53 = vector.broadcast %52 : vector<1x128xf32> to vector<32x128xf32>
    %54 = arith.addf %51, %53 : vector<32x128xf32>
    %cst_27 = arith.constant 0.000000e+00 : f32
    %55 = vector.broadcast %cst_27 : f32 to vector<32x128xf32>
    %56 = arith.maximumf %54, %55 : vector<32x128xf32>
    %57 = arith.truncf %18 : vector<32x4xf32> to vector<32x4xbf16>
    %c0_28 = arith.constant 0 : index
    %c0_29 = arith.constant 0 : index
    %58 = vector.load %arg6[%c0_28, %c0_29] : memref<4x128xbf16, #tpu.memory_space<vmem>>, vector<4x128xbf16>
    %cst_30 = arith.constant dense<0.000000e+00> : vector<32x128xf32>
    %59 = tpu.matmul %57, %58, %cst_30 {dimension_numbers = #tpu.dot_dimension_numbers<[1], [0], [0], [1], [0, 0, 1, 1], [], []>} : vector<32x4xbf16>, vector<4x128xbf16>, vector<32x128xf32> -> vector<32x128xf32>
    %c0_31 = arith.constant 0 : index
    %c0_32 = arith.constant 0 : index
    %60 = vector.load %arg7[%c0_31, %c0_32] : memref<1x128xf32, #tpu.memory_space<vmem>>, vector<1x128xf32>
    %61 = vector.broadcast %60 : vector<1x128xf32> to vector<32x128xf32>
    %62 = arith.addf %59, %61 : vector<32x128xf32>
    %63 = arith.addf %56, %62 : vector<32x128xf32>
    %cst_33 = arith.constant 0.000000e+00 : f32
    %64 = vector.broadcast %cst_33 : f32 to vector<32x128xf32>
    %65 = arith.maximumf %63, %64 : vector<32x128xf32>
    %c2_i32 = arith.constant 2 : i32
    %66 = vector.broadcast %c2_i32 : i32 to vector<32x1xi32>
    %67 = arith.cmpi sge, %16, %66 : vector<32x1xi32>
    %68 = arith.extui %67 : vector<32x1xi1> to vector<32x1xi32>
    %69 = arith.sitofp %68 : vector<32x1xi32> to vector<32x1xf32>
    %70 = arith.truncf %65 : vector<32x128xf32> to vector<32x128xbf16>
    %c0_34 = arith.constant 0 : index
    %c0_35 = arith.constant 0 : index
    %c0_36 = arith.constant 0 : index
    %71 = vector.load %arg8[%c0_34, %c0_35, %c0_36] : memref<2x128x128xbf16, #tpu.memory_space<vmem>>, vector<1x128x128xbf16>
    %72 = vector.shape_cast %71 : vector<1x128x128xbf16> to vector<128x128xbf16>
    %cst_37 = arith.constant dense<0.000000e+00> : vector<32x128xf32>
    %73 = tpu.matmul %70, %72, %cst_37 {dimension_numbers = #tpu.dot_dimension_numbers<[1], [0], [0], [1], [0, 0, 1, 1], [], []>} : vector<32x128xbf16>, vector<128x128xbf16>, vector<32x128xf32> -> vector<32x128xf32>
    %c2_i32_38 = arith.constant 2 : i32
    %74 = tpu.dynamic_rotate %65 by %c2_i32_38 dim 0 : vector<32x128xf32>, i32 -> vector<32x128xf32>
    %75 = vector.broadcast %69 : vector<32x1xf32> to vector<32x128xf32>
    %76 = arith.mulf %74, %75 : vector<32x128xf32>
    %77 = arith.truncf %76 : vector<32x128xf32> to vector<32x128xbf16>
    %c1_39 = arith.constant 1 : index
    %c0_40 = arith.constant 0 : index
    %c0_41 = arith.constant 0 : index
    %78 = vector.load %arg8[%c1_39, %c0_40, %c0_41] : memref<2x128x128xbf16, #tpu.memory_space<vmem>>, vector<1x128x128xbf16>
    %79 = vector.shape_cast %78 : vector<1x128x128xbf16> to vector<128x128xbf16>
    %cst_42 = arith.constant dense<0.000000e+00> : vector<32x128xf32>
    %80 = tpu.matmul %77, %79, %cst_42 {dimension_numbers = #tpu.dot_dimension_numbers<[1], [0], [0], [1], [0, 0, 1, 1], [], []>} : vector<32x128xbf16>, vector<128x128xbf16>, vector<32x128xf32> -> vector<32x128xf32>
    %81 = arith.addf %73, %80 : vector<32x128xf32>
    %c0_43 = arith.constant 0 : index
    %c0_44 = arith.constant 0 : index
    %82 = vector.load %arg9[%c0_43, %c0_44] : memref<1x128xf32, #tpu.memory_space<vmem>>, vector<1x128xf32>
    %83 = vector.broadcast %82 : vector<1x128xf32> to vector<32x128xf32>
    %84 = arith.addf %81, %83 : vector<32x128xf32>
    %cst_45 = arith.constant 0.000000e+00 : f32
    %85 = vector.broadcast %cst_45 : f32 to vector<32x128xf32>
    %86 = arith.maximumf %84, %85 : vector<32x128xf32>
    %87 = arith.truncf %86 : vector<32x128xf32> to vector<32x128xbf16>
    %c0_46 = arith.constant 0 : index
    %c0_47 = arith.constant 0 : index
    %c0_48 = arith.constant 0 : index
    %88 = vector.load %arg10[%c0_46, %c0_47, %c0_48] : memref<2x128x128xbf16, #tpu.memory_space<vmem>>, vector<1x128x128xbf16>
    %89 = vector.shape_cast %88 : vector<1x128x128xbf16> to vector<128x128xbf16>
    %cst_49 = arith.constant dense<0.000000e+00> : vector<32x128xf32>
    %90 = tpu.matmul %87, %89, %cst_49 {dimension_numbers = #tpu.dot_dimension_numbers<[1], [0], [0], [1], [0, 0, 1, 1], [], []>} : vector<32x128xbf16>, vector<128x128xbf16>, vector<32x128xf32> -> vector<32x128xf32>
    %c2_i32_50 = arith.constant 2 : i32
    %91 = tpu.dynamic_rotate %86 by %c2_i32_50 dim 0 : vector<32x128xf32>, i32 -> vector<32x128xf32>
    %92 = vector.broadcast %69 : vector<32x1xf32> to vector<32x128xf32>
    %93 = arith.mulf %91, %92 : vector<32x128xf32>
    %94 = arith.truncf %93 : vector<32x128xf32> to vector<32x128xbf16>
    %c1_51 = arith.constant 1 : index
    %c0_52 = arith.constant 0 : index
    %c0_53 = arith.constant 0 : index
    %95 = vector.load %arg10[%c1_51, %c0_52, %c0_53] : memref<2x128x128xbf16, #tpu.memory_space<vmem>>, vector<1x128x128xbf16>
    %96 = vector.shape_cast %95 : vector<1x128x128xbf16> to vector<128x128xbf16>
    %cst_54 = arith.constant dense<0.000000e+00> : vector<32x128xf32>
    %97 = tpu.matmul %94, %96, %cst_54 {dimension_numbers = #tpu.dot_dimension_numbers<[1], [0], [0], [1], [0, 0, 1, 1], [], []>} : vector<32x128xbf16>, vector<128x128xbf16>, vector<32x128xf32> -> vector<32x128xf32>
    %98 = arith.addf %90, %97 : vector<32x128xf32>
    %c0_55 = arith.constant 0 : index
    %c0_56 = arith.constant 0 : index
    %99 = vector.load %arg11[%c0_55, %c0_56] : memref<1x128xf32, #tpu.memory_space<vmem>>, vector<1x128xf32>
    %100 = vector.broadcast %99 : vector<1x128xf32> to vector<32x128xf32>
    %101 = arith.addf %98, %100 : vector<32x128xf32>
    %cst_57 = arith.constant 0.000000e+00 : f32
    %102 = vector.broadcast %cst_57 : f32 to vector<32x128xf32>
    %103 = arith.maximumf %101, %102 : vector<32x128xf32>
    %104 = arith.truncf %65 : vector<32x128xf32> to vector<32x128xbf16>
    %c0_58 = arith.constant 0 : index
    %c0_59 = arith.constant 0 : index
    %105 = vector.load %arg12[%c0_58, %c0_59] : memref<128x128xbf16, #tpu.memory_space<vmem>>, vector<128x128xbf16>
    %cst_60 = arith.constant dense<0.000000e+00> : vector<32x128xf32>
    %106 = tpu.matmul %104, %105, %cst_60 {dimension_numbers = #tpu.dot_dimension_numbers<[1], [0], [0], [1], [0, 0, 1, 1], [], []>} : vector<32x128xbf16>, vector<128x128xbf16>, vector<32x128xf32> -> vector<32x128xf32>
    %c0_61 = arith.constant 0 : index
    %c0_62 = arith.constant 0 : index
    %107 = vector.load %arg13[%c0_61, %c0_62] : memref<1x128xf32, #tpu.memory_space<vmem>>, vector<1x128xf32>
    %108 = vector.broadcast %107 : vector<1x128xf32> to vector<32x128xf32>
    %109 = arith.addf %106, %108 : vector<32x128xf32>
    %110 = arith.addf %103, %109 : vector<32x128xf32>
    %cst_63 = arith.constant 0.000000e+00 : f32
    %111 = vector.broadcast %cst_63 : f32 to vector<32x128xf32>
    %112 = arith.maximumf %110, %111 : vector<32x128xf32>
    %c4_i32 = arith.constant 4 : i32
    %113 = vector.broadcast %c4_i32 : i32 to vector<32x1xi32>
    %114 = arith.cmpi sge, %16, %113 : vector<32x1xi32>
    %115 = arith.extui %114 : vector<32x1xi1> to vector<32x1xi32>
    %116 = arith.sitofp %115 : vector<32x1xi32> to vector<32x1xf32>
    %117 = arith.truncf %112 : vector<32x128xf32> to vector<32x128xbf16>
    %c0_64 = arith.constant 0 : index
    %c0_65 = arith.constant 0 : index
    %c0_66 = arith.constant 0 : index
    %118 = vector.load %arg14[%c0_64, %c0_65, %c0_66] : memref<2x128x128xbf16, #tpu.memory_space<vmem>>, vector<1x128x128xbf16>
    %119 = vector.shape_cast %118 : vector<1x128x128xbf16> to vector<128x128xbf16>
    %cst_67 = arith.constant dense<0.000000e+00> : vector<32x128xf32>
    %120 = tpu.matmul %117, %119, %cst_67 {dimension_numbers = #tpu.dot_dimension_numbers<[1], [0], [0], [1], [0, 0, 1, 1], [], []>} : vector<32x128xbf16>, vector<128x128xbf16>, vector<32x128xf32> -> vector<32x128xf32>
    %c4_i32_68 = arith.constant 4 : i32
    %121 = tpu.dynamic_rotate %112 by %c4_i32_68 dim 0 : vector<32x128xf32>, i32 -> vector<32x128xf32>
    %122 = vector.broadcast %116 : vector<32x1xf32> to vector<32x128xf32>
    %123 = arith.mulf %121, %122 : vector<32x128xf32>
    %124 = arith.truncf %123 : vector<32x128xf32> to vector<32x128xbf16>
    %c1_69 = arith.constant 1 : index
    %c0_70 = arith.constant 0 : index
    %c0_71 = arith.constant 0 : index
    %125 = vector.load %arg14[%c1_69, %c0_70, %c0_71] : memref<2x128x128xbf16, #tpu.memory_space<vmem>>, vector<1x128x128xbf16>
    %126 = vector.shape_cast %125 : vector<1x128x128xbf16> to vector<128x128xbf16>
    %cst_72 = arith.constant dense<0.000000e+00> : vector<32x128xf32>
    %127 = tpu.matmul %124, %126, %cst_72 {dimension_numbers = #tpu.dot_dimension_numbers<[1], [0], [0], [1], [0, 0, 1, 1], [], []>} : vector<32x128xbf16>, vector<128x128xbf16>, vector<32x128xf32> -> vector<32x128xf32>
    %128 = arith.addf %120, %127 : vector<32x128xf32>
    %c0_73 = arith.constant 0 : index
    %c0_74 = arith.constant 0 : index
    %129 = vector.load %arg15[%c0_73, %c0_74] : memref<1x128xf32, #tpu.memory_space<vmem>>, vector<1x128xf32>
    %130 = vector.broadcast %129 : vector<1x128xf32> to vector<32x128xf32>
    %131 = arith.addf %128, %130 : vector<32x128xf32>
    %cst_75 = arith.constant 0.000000e+00 : f32
    %132 = vector.broadcast %cst_75 : f32 to vector<32x128xf32>
    %133 = arith.maximumf %131, %132 : vector<32x128xf32>
    %134 = arith.truncf %133 : vector<32x128xf32> to vector<32x128xbf16>
    %c0_76 = arith.constant 0 : index
    %c0_77 = arith.constant 0 : index
    %c0_78 = arith.constant 0 : index
    %135 = vector.load %arg16[%c0_76, %c0_77, %c0_78] : memref<2x128x128xbf16, #tpu.memory_space<vmem>>, vector<1x128x128xbf16>
    %136 = vector.shape_cast %135 : vector<1x128x128xbf16> to vector<128x128xbf16>
    %cst_79 = arith.constant dense<0.000000e+00> : vector<32x128xf32>
    %137 = tpu.matmul %134, %136, %cst_79 {dimension_numbers = #tpu.dot_dimension_numbers<[1], [0], [0], [1], [0, 0, 1, 1], [], []>} : vector<32x128xbf16>, vector<128x128xbf16>, vector<32x128xf32> -> vector<32x128xf32>
    %c4_i32_80 = arith.constant 4 : i32
    %138 = tpu.dynamic_rotate %133 by %c4_i32_80 dim 0 : vector<32x128xf32>, i32 -> vector<32x128xf32>
    %139 = vector.broadcast %116 : vector<32x1xf32> to vector<32x128xf32>
    %140 = arith.mulf %138, %139 : vector<32x128xf32>
    %141 = arith.truncf %140 : vector<32x128xf32> to vector<32x128xbf16>
    %c1_81 = arith.constant 1 : index
    %c0_82 = arith.constant 0 : index
    %c0_83 = arith.constant 0 : index
    %142 = vector.load %arg16[%c1_81, %c0_82, %c0_83] : memref<2x128x128xbf16, #tpu.memory_space<vmem>>, vector<1x128x128xbf16>
    %143 = vector.shape_cast %142 : vector<1x128x128xbf16> to vector<128x128xbf16>
    %cst_84 = arith.constant dense<0.000000e+00> : vector<32x128xf32>
    %144 = tpu.matmul %141, %143, %cst_84 {dimension_numbers = #tpu.dot_dimension_numbers<[1], [0], [0], [1], [0, 0, 1, 1], [], []>} : vector<32x128xbf16>, vector<128x128xbf16>, vector<32x128xf32> -> vector<32x128xf32>
    %145 = arith.addf %137, %144 : vector<32x128xf32>
    %c0_85 = arith.constant 0 : index
    %c0_86 = arith.constant 0 : index
    %146 = vector.load %arg17[%c0_85, %c0_86] : memref<1x128xf32, #tpu.memory_space<vmem>>, vector<1x128xf32>
    %147 = vector.broadcast %146 : vector<1x128xf32> to vector<32x128xf32>
    %148 = arith.addf %145, %147 : vector<32x128xf32>
    %cst_87 = arith.constant 0.000000e+00 : f32
    %149 = vector.broadcast %cst_87 : f32 to vector<32x128xf32>
    %150 = arith.maximumf %148, %149 : vector<32x128xf32>
    %151 = arith.addf %150, %112 : vector<32x128xf32>
    %cst_88 = arith.constant 0.000000e+00 : f32
    %152 = vector.broadcast %cst_88 : f32 to vector<32x128xf32>
    %153 = arith.maximumf %151, %152 : vector<32x128xf32>
    %c0_89 = arith.constant 0 : index
    %c0_90 = arith.constant 0 : index
    %154 = vector.load %arg21[%c0_89, %c0_90] : memref<32x128xf32, #tpu.memory_space<vmem>>, vector<32x128xf32>
    tpu.vector_store %arg21[%c0_89, %c0_90], %153 {strides = array<i32>} : memref<32x128xf32, #tpu.memory_space<vmem>>, vector<32x128xf32>,
    %c15 = arith.constant 15 : index
    %c0_91 = arith.constant 0 : index
    %155 = tpu.strided_load %arg21[%c15, %c0_91] {strides = array<i32: 16, 1>} : memref<32x128xf32, #tpu.memory_space<vmem>>, vector<2x128xf32>
    %156 = arith.truncf %155 : vector<2x128xf32> to vector<2x128xbf16>
    %c0_92 = arith.constant 0 : index
    %c0_93 = arith.constant 0 : index
    %157 = vector.load %arg18[%c0_92, %c0_93] : memref<128x128xbf16, #tpu.memory_space<vmem>>, vector<128x128xbf16>
    %cst_94 = arith.constant dense<0.000000e+00> : vector<2x128xf32>
    %158 = tpu.matmul %156, %157, %cst_94 {dimension_numbers = #tpu.dot_dimension_numbers<[1], [0], [0], [1], [0, 0, 1, 1], [], []>} : vector<2x128xbf16>, vector<128x128xbf16>, vector<2x128xf32> -> vector<2x128xf32>
    %c0_95 = arith.constant 0 : index
    %c0_96 = arith.constant 0 : index
    %159 = vector.load %arg19[%c0_95, %c0_96] : memref<1x128xf32, #tpu.memory_space<vmem>>, vector<1x128xf32>
    %160 = vector.broadcast %159 : vector<1x128xf32> to vector<2x128xf32>
    %161 = arith.addf %158, %160 : vector<2x128xf32>
    %162 = math.absf %161 : vector<2x128xf32>
    %cst_97 = arith.constant 0.000000e+00 : f32
    %163 = vector.broadcast %cst_97 : f32 to vector<2x128xf32>
    %164 = arith.subf %163, %162 : vector<2x128xf32>
    %165 = math.exp %164 : vector<2x128xf32>
    %cst_98 = arith.constant 0.000000e+00 : f32
    %166 = vector.broadcast %cst_98 : f32 to vector<2x128xf32>
    %167 = arith.cmpf oge, %161, %166 : vector<2x128xf32>
    %cst_99 = arith.constant 1.000000e+00 : f32
    %168 = vector.broadcast %cst_99 : f32 to vector<2x128xf32>
    %169 = arith.addf %168, %165 : vector<2x128xf32>
    %cst_100 = arith.constant 1.000000e+00 : f32
    %170 = vector.broadcast %cst_100 : f32 to vector<2x128xf32>
    %171 = arith.divf %170, %169 : vector<2x128xf32>
    %cst_101 = arith.constant 1.000000e+00 : f32
    %172 = vector.broadcast %cst_101 : f32 to vector<2x128xf32>
    %173 = arith.addf %172, %165 : vector<2x128xf32>
    %174 = arith.divf %165, %173 : vector<2x128xf32>
    %175 = arith.select %167, %171, %174 : vector<2x128xi1>, vector<2x128xf32>
    %176 = vector.shape_cast %175 : vector<2x128xf32> to vector<2x1x128xf32>
    %c0_102 = arith.constant 0 : index
    %c0_103 = arith.constant 0 : index
    %c0_104 = arith.constant 0 : index
    %177 = vector.load %arg20[%c0_102, %c0_103, %c0_104] : memref<2x1x128xf32, #tpu.memory_space<vmem>>, vector<2x1x128xf32>
    tpu.vector_store %arg20[%c0_102, %c0_103, %c0_104], %176 {strides = array<i32>} : memref<2x1x128xf32, #tpu.memory_space<vmem>>, vector<2x1x128xf32>,
    return
  }
  func.func @transform_0(%arg0: i32) -> (i32, i32, i32) {
    %c0_i32 = arith.constant 0 : i32
    %c0_i32_0 = arith.constant 0 : i32
    %c0_i32_1 = arith.constant 0 : i32
    return %arg0, %c0_i32, %c0_i32_0 : i32, i32, i32
  }
  func.func @transform_1(%arg0: i32) -> (i32, i32, i32) {
    %c0_i32 = arith.constant 0 : i32
    %c0_i32_0 = arith.constant 0 : i32
    %c0_i32_1 = arith.constant 0 : i32
    %c0_i32_2 = arith.constant 0 : i32
    return %c0_i32, %c0_i32_0, %c0_i32_1 : i32, i32, i32
  }
  func.func @transform_2(%arg0: i32) -> (i32, i32) {
    %c0_i32 = arith.constant 0 : i32
    %c0_i32_0 = arith.constant 0 : i32
    %c0_i32_1 = arith.constant 0 : i32
    return %c0_i32, %c0_i32_0 : i32, i32
  }
  func.func @transform_3(%arg0: i32) -> (i32, i32, i32) {
    %c0_i32 = arith.constant 0 : i32
    %c0_i32_0 = arith.constant 0 : i32
    %c0_i32_1 = arith.constant 0 : i32
    %c0_i32_2 = arith.constant 0 : i32
    return %c0_i32, %c0_i32_0, %c0_i32_1 : i32, i32, i32
  }
  func.func @transform_4(%arg0: i32) -> (i32, i32) {
    %c0_i32 = arith.constant 0 : i32
    %c0_i32_0 = arith.constant 0 : i32
    %c0_i32_1 = arith.constant 0 : i32
    return %c0_i32, %c0_i32_0 : i32, i32
  }
  func.func @transform_5(%arg0: i32) -> (i32, i32) {
    %c0_i32 = arith.constant 0 : i32
    %c0_i32_0 = arith.constant 0 : i32
    %c0_i32_1 = arith.constant 0 : i32
    return %c0_i32, %c0_i32_0 : i32, i32
  }
  func.func @transform_6(%arg0: i32) -> (i32, i32) {
    %c0_i32 = arith.constant 0 : i32
    %c0_i32_0 = arith.constant 0 : i32
    %c0_i32_1 = arith.constant 0 : i32
    return %c0_i32, %c0_i32_0 : i32, i32
  }
  func.func @transform_7(%arg0: i32) -> (i32, i32, i32) {
    %c0_i32 = arith.constant 0 : i32
    %c0_i32_0 = arith.constant 0 : i32
    %c0_i32_1 = arith.constant 0 : i32
    %c0_i32_2 = arith.constant 0 : i32
    return %c0_i32, %c0_i32_0, %c0_i32_1 : i32, i32, i32
  }
  func.func @transform_8(%arg0: i32) -> (i32, i32) {
    %c0_i32 = arith.constant 0 : i32
    %c0_i32_0 = arith.constant 0 : i32
    %c0_i32_1 = arith.constant 0 : i32
    return %c0_i32, %c0_i32_0 : i32, i32
  }
  func.func @transform_9(%arg0: i32) -> (i32, i32, i32) {
    %c0_i32 = arith.constant 0 : i32
    %c0_i32_0 = arith.constant 0 : i32
    %c0_i32_1 = arith.constant 0 : i32
    %c0_i32_2 = arith.constant 0 : i32
    return %c0_i32, %c0_i32_0, %c0_i32_1 : i32, i32, i32
  }
  func.func @transform_10(%arg0: i32) -> (i32, i32) {
    %c0_i32 = arith.constant 0 : i32
    %c0_i32_0 = arith.constant 0 : i32
    %c0_i32_1 = arith.constant 0 : i32
    return %c0_i32, %c0_i32_0 : i32, i32
  }
  func.func @transform_11(%arg0: i32) -> (i32, i32) {
    %c0_i32 = arith.constant 0 : i32
    %c0_i32_0 = arith.constant 0 : i32
    %c0_i32_1 = arith.constant 0 : i32
    return %c0_i32, %c0_i32_0 : i32, i32
  }
  func.func @transform_12(%arg0: i32) -> (i32, i32) {
    %c0_i32 = arith.constant 0 : i32
    %c0_i32_0 = arith.constant 0 : i32
    %c0_i32_1 = arith.constant 0 : i32
    return %c0_i32, %c0_i32_0 : i32, i32
  }
  func.func @transform_13(%arg0: i32) -> (i32, i32, i32) {
    %c0_i32 = arith.constant 0 : i32
    %c0_i32_0 = arith.constant 0 : i32
    %c0_i32_1 = arith.constant 0 : i32
    %c0_i32_2 = arith.constant 0 : i32
    return %c0_i32, %c0_i32_0, %c0_i32_1 : i32, i32, i32
  }
  func.func @transform_14(%arg0: i32) -> (i32, i32) {
    %c0_i32 = arith.constant 0 : i32
    %c0_i32_0 = arith.constant 0 : i32
    %c0_i32_1 = arith.constant 0 : i32
    return %c0_i32, %c0_i32_0 : i32, i32
  }
  func.func @transform_15(%arg0: i32) -> (i32, i32, i32) {
    %c0_i32 = arith.constant 0 : i32
    %c0_i32_0 = arith.constant 0 : i32
    %c0_i32_1 = arith.constant 0 : i32
    %c0_i32_2 = arith.constant 0 : i32
    return %c0_i32, %c0_i32_0, %c0_i32_1 : i32, i32, i32
  }
  func.func @transform_16(%arg0: i32) -> (i32, i32) {
    %c0_i32 = arith.constant 0 : i32
    %c0_i32_0 = arith.constant 0 : i32
    %c0_i32_1 = arith.constant 0 : i32
    return %c0_i32, %c0_i32_0 : i32, i32
  }
  func.func @transform_17(%arg0: i32) -> (i32, i32) {
    %c0_i32 = arith.constant 0 : i32
    %c0_i32_0 = arith.constant 0 : i32
    %c0_i32_1 = arith.constant 0 : i32
    return %c0_i32, %c0_i32_0 : i32, i32
  }
  func.func @transform_18(%arg0: i32) -> (i32, i32) {
    %c0_i32 = arith.constant 0 : i32
    %c0_i32_0 = arith.constant 0 : i32
    %c0_i32_1 = arith.constant 0 : i32
    return %c0_i32, %c0_i32_0 : i32, i32
  }
  func.func @transform_19(%arg0: i32) -> (i32, i32, i32) {
    %c0_i32 = arith.constant 0 : i32
    %c0_i32_0 = arith.constant 0 : i32
    %c0_i32_1 = arith.constant 0 : i32
    return %arg0, %c0_i32, %c0_i32_0 : i32, i32, i32
  }
}

</mosaic_0001>

<llo_original>
// kernel: tcn_forward.1
$region0: #{tcn_forward.1}
  #allocation0 [shape = 'u32[]', space=smem, size = 0x4, offset = 0x4, fixed_abs, tag = 'smem constant byte address 0x4 - core index']
  #allocation1 [shape = 'u32[72,128]{1,0:T(1,128)}', space=vmem, size = 0x9000, scoped, tag = 'internal scratch']
  #allocation2 [shape = 'f32[32,128]{1,0:T(8,128)}', space=vmem, size = 0x4000, scoped, tag = 'scratch operand']
  %s0 = inlined_call_operand.vmem [shape: f32[2,16,4], index: 0, kind: input, shape index: {}]
  %s1 = inlined_call_operand.vmem [shape: bf16[2,4,128], index: 1, kind: input, shape index: {}]
  %s2 = inlined_call_operand.vmem [shape: f32[1,128], index: 2, kind: input, shape index: {}]
  %s3 = inlined_call_operand.hbm [shape: bf16[2,128,128], index: 3, kind: input, shape index: {}]
  %s4 = inlined_call_operand.vmem [shape: f32[1,128], index: 4, kind: input, shape index: {}]
  %s5 = inlined_call_operand.vmem [shape: bf16[4,128], index: 5, kind: input, shape index: {}]
  %s6 = inlined_call_operand.vmem [shape: f32[1,128], index: 6, kind: input, shape index: {}]
  %s7 = inlined_call_operand.hbm [shape: bf16[2,128,128], index: 7, kind: input, shape index: {}]
  %s8 = inlined_call_operand.vmem [shape: f32[1,128], index: 8, kind: input, shape index: {}]
  %s9 = inlined_call_operand.hbm [shape: bf16[2,128,128], index: 9, kind: input, shape index: {}]
  %s10 = inlined_call_operand.vmem [shape: f32[1,128], index: 10, kind: input, shape index: {}]
  %s11 = inlined_call_operand.hbm [shape: bf16[128,128], index: 11, kind: input, shape index: {}]
  %s12 = inlined_call_operand.vmem [shape: f32[1,128], index: 12, kind: input, shape index: {}]
  %s13 = inlined_call_operand.hbm [shape: bf16[2,128,128], index: 13, kind: input, shape index: {}]
  %s14 = inlined_call_operand.vmem [shape: f32[1,128], index: 14, kind: input, shape index: {}]
  %s15 = inlined_call_operand.hbm [shape: bf16[2,128,128], index: 15, kind: input, shape index: {}]
  %s16 = inlined_call_operand.vmem [shape: f32[1,128], index: 16, kind: input, shape index: {}]
  %s17 = inlined_call_operand.vmem [shape: bf16[128,128], index: 17, kind: input, shape index: {}]
  %s18 = inlined_call_operand.vmem [shape: f32[1,128], index: 18, kind: input, shape index: {}]
  %s19 = inlined_call_operand.vmem [shape: f32[2,1,128], index: 19, kind: output, shape index: {}]
  %s20 = sld [smem:[#allocation0]]
  $region110: #{tcn_forward.1} parent=0
    _
  %s22 = ssub.s32 1, %s20
  %s23 = scalar_select 0, %s22, %s20
  $region1: #{tcn_forward.1} parent=0
    #allocation3 [shape = 'u8[65536]{0}', space=vmem, size = 0x10000, scoped, tag = 'input window, operand 3, single buffered']
    #allocation4 [shape = 's32[1]{0}', space=sflag, size = 0x4, scoped, tag = 'scoped memory for tcn_forward.1']
    #allocation5 [shape = 'u8[65536]{0}', space=vmem, size = 0x10000, scoped, tag = 'input window, operand 7, single buffered']
    #allocation6 [shape = 's32[1]{0}', space=sflag, size = 0x4, scoped, tag = 'scoped memory for tcn_forward.1']
    #allocation7 [shape = 'u8[65536]{0}', space=vmem, size = 0x10000, scoped, tag = 'input window, operand 9, single buffered']
    #allocation8 [shape = 'u8[32768]{0}', space=vmem, size = 0x8000, scoped, tag = 'input window, operand 11, single buffered']
    #allocation9 [shape = 's32[1]{0}', space=sflag, size = 0x4, scoped, tag = 'scoped memory for tcn_forward.1']
    #allocation10 [shape = 'u8[65536]{0}', space=vmem, size = 0x10000, scoped, tag = 'input window, operand 13, single buffered']
    #allocation11 [shape = 'u8[65536]{0}', space=vmem, size = 0x10000, scoped, tag = 'input window, operand 15, single buffered']
    #allocation12 [shape = 's32[1]{0}', space=sflag, size = 0x4, scoped, tag = 'scoped memory for tcn_forward.1']
    %24 = vsyncpa [#allocation4], 0
    %25 = vsyncpa [#allocation6], 0
    %26 = vsyncpa [#allocation9], 0
    %27 = vsyncpa [#allocation12], 0
    // Predicated region
    $region2: #{tcn_forward.1} parent=1 // pred_check
      _
    $region3: #{tcn_forward.1} parent=1 // pred_check_branch
      %29 = sbr.rel (0) target = $region5
    $region4: #{tcn_forward.1} parent=1 // pred_region
      _
    $region5: #{tcn_forward.1} parent=1 // pred_fallthru
      _
    // Predicated region
    $region6: #{tcn_forward.1} parent=1 // pred_check
      _
    $region7: #{tcn_forward.1} parent=1 // pred_check_branch
      %31 = sbr.rel (0) target = $region9
    $region8: #{tcn_forward.1} parent=1 // pred_region
      _
    $region9: #{tcn_forward.1} parent=1 // pred_fallthru
      _
    // Predicated region
    $region10: #{tcn_forward.1} parent=1 // pred_check
      _
    $region11: #{tcn_forward.1} parent=1 // pred_check_branch
      %33 = sbr.rel (0) target = $region13
    $region12: #{tcn_forward.1} parent=1 // pred_region
      _
    $region13: #{tcn_forward.1} parent=1 // pred_fallthru
      _
    // Predicated region
    $region14: #{tcn_forward.1} parent=1 // pred_check
      _
    $region15: #{tcn_forward.1} parent=1 // pred_check_branch
      %35 = sbr.rel (0) target = $region17
    $region16: #{tcn_forward.1} parent=1 // pred_region
      %37 = vsyncadd [#allocation4], 0
      %s38 = sshll.u32 %s3, 4
      %s39 = int_to_ptr.hbm [resolvable:$true] %s38
      %s40 = sshll.u32 [#allocation3], 4
      %s41 = int_to_ptr.vmem [resolvable:$true] %s40
      %46 = dma.hbm_to_vmem [thread:$0]  %s39, 2048, %s41, [#allocation4], 64, 64, 4
    $region17: #{tcn_forward.1} parent=1 // pred_fallthru
      _
    // Predicated region
    $region18: #{tcn_forward.1} parent=1 // pred_check
      _
    $region19: #{tcn_forward.1} parent=1 // pred_check_branch
      %48 = sbr.rel (0) target = $region21
    $region20: #{tcn_forward.1} parent=1 // pred_region
      _
    $region21: #{tcn_forward.1} parent=1 // pred_fallthru
      _
    // Predicated region
    $region22: #{tcn_forward.1} parent=1 // pred_check
      _
    $region23: #{tcn_forward.1} parent=1 // pred_check_branch
      %50 = sbr.rel (0) target = $region25
    $region24: #{tcn_forward.1} parent=1 // pred_region
      _
    $region25: #{tcn_forward.1} parent=1 // pred_fallthru
      _
    // Predicated region
    $region26: #{tcn_forward.1} parent=1 // pred_check
      _
    $region27: #{tcn_forward.1} parent=1 // pred_check_branch
      %52 = sbr.rel (0) target = $region29
    $region28: #{tcn_forward.1} parent=1 // pred_region
      _
    $region29: #{tcn_forward.1} parent=1 // pred_fallthru
      _
    // Predicated region
    $region30: #{tcn_forward.1} parent=1 // pred_check
      _
    $region31: #{tcn_forward.1} parent=1 // pred_check_branch
      %54 = sbr.rel (0) target = $region33
    $region32: #{tcn_forward.1} parent=1 // pred_region
      %56 = vsyncadd [#allocation6], 0
      %s57 = sshll.u32 %s7, 4
      %s58 = int_to_ptr.hbm [resolvable:$true] %s57
      %s59 = sshll.u32 [#allocation5], 4
      %s60 = int_to_ptr.vmem [resolvable:$true] %s59
      %65 = dma.hbm_to_vmem [thread:$0]  %s58, 2048, %s60, [#allocation6], 64, 64, 4
    $region33: #{tcn_forward.1} parent=1 // pred_fallthru
      _
    // Predicated region
    $region34: #{tcn_forward.1} parent=1 // pred_check
      _
    $region35: #{tcn_forward.1} parent=1 // pred_check_branch
      %67 = sbr.rel (0) target = $region37
    $region36: #{tcn_forward.1} parent=1 // pred_region
      _
    $region37: #{tcn_forward.1} parent=1 // pred_fallthru
      _
    // Predicated region
    $region38: #{tcn_forward.1} parent=1 // pred_check
      _
    $region39: #{tcn_forward.1} parent=1 // pred_check_branch
      %69 = sbr.rel (0) target = $region41
    $region40: #{tcn_forward.1} parent=1 // pred_region
      %71 = vsyncadd [#allocation6], 0
      %s72 = sshll.u32 %s9, 4
      %s73 = int_to_ptr.hbm [resolvable:$true] %s72
      %s74 = sshll.u32 [#allocation7], 4
      %s75 = int_to_ptr.vmem [resolvable:$true] %s74
      %80 = dma.hbm_to_vmem [thread:$0]  %s73, 2048, %s75, [#allocation6], 64, 64, 4
    $region41: #{tcn_forward.1} parent=1 // pred_fallthru
      _
    // Predicated region
    $region42: #{tcn_forward.1} parent=1 // pred_check
      _
    $region43: #{tcn_forward.1} parent=1 // pred_check_branch
      %82 = sbr.rel (0) target = $region45
    $region44: #{tcn_forward.1} parent=1 // pred_region
      _
    $region45: #{tcn_forward.1} parent=1 // pred_fallthru
      _
    // Predicated region
    $region46: #{tcn_forward.1} parent=1 // pred_check
      _
    $region47: #{tcn_forward.1} parent=1 // pred_check_branch
      %84 = sbr.rel (0) target = $region49
    $region48: #{tcn_forward.1} parent=1 // pred_region
      %86 = vsyncadd [#allocation9], 0
      %s87 = sshll.u32 %s11, 4
      %s88 = int_to_ptr.hbm [resolvable:$true] %s87
      %s89 = sshll.u32 [#allocation8], 4
      %s90 = int_to_ptr.vmem [resolvable:$true] %s89
      %95 = dma.hbm_to_vmem [thread:$0]  %s88, 1024, %s90, [#allocation9], 64, 64, 4
    $region49: #{tcn_forward.1} parent=1 // pred_fallthru
      _
    // Predicated region
    $region50: #{tcn_forward.1} parent=1 // pred_check
      _
    $region51: #{tcn_forward.1} parent=1 // pred_check_branch
      %97 = sbr.rel (0) target = $region53
    $region52: #{tcn_forward.1} parent=1 // pred_region
      _
    $region53: #{tcn_forward.1} parent=1 // pred_fallthru
      _
    // Predicated region
    $region54: #{tcn_forward.1} parent=1 // pred_check
      _
    $region55: #{tcn_forward.1} parent=1 // pred_check_branch
      %99 = sbr.rel (0) target = $region57
    $region56: #{tcn_forward.1} parent=1 // pred_region
      %101 = vsyncadd [#allocation9], 0
      %s102 = sshll.u32 %s13, 4
      %s103 = int_to_ptr.hbm [resolvable:$true] %s102
      %s104 = sshll.u32 [#allocation10], 4
      %s105 = int_to_ptr.vmem [resolvable:$true] %s104
      %110 = dma.hbm_to_vmem [thread:$0]  %s103, 2048, %s105, [#allocation9], 64, 64, 4
    $region57: #{tcn_forward.1} parent=1 // pred_fallthru
      _
    // Predicated region
    $region58: #{tcn_forward.1} parent=1 // pred_check
      _
    $region59: #{tcn_forward.1} parent=1 // pred_check_branch
      %112 = sbr.rel (0) target = $region61
    $region60: #{tcn_forward.1} parent=1 // pred_region
      _
    $region61: #{tcn_forward.1} parent=1 // pred_fallthru
      _
    // Predicated region
    $region62: #{tcn_forward.1} parent=1 // pred_check
      _
    $region63: #{tcn_forward.1} parent=1 // pred_check_branch
      %114 = sbr.rel (0) target = $region65
    $region64: #{tcn_forward.1} parent=1 // pred_region
      %116 = vsyncadd [#allocation12], 0
      %s117 = sshll.u32 %s15, 4
      %s118 = int_to_ptr.hbm [resolvable:$true] %s117
      %s119 = sshll.u32 [#allocation11], 4
      %s120 = int_to_ptr.vmem [resolvable:$true] %s119
      %125 = dma.hbm_to_vmem [thread:$0]  %s118, 2048, %s120, [#allocation12], 64, 64, 4
    $region65: #{tcn_forward.1} parent=1 // pred_fallthru
      _
    // Predicated region
    $region66: #{tcn_forward.1} parent=1 // pred_check
      _
    $region67: #{tcn_forward.1} parent=1 // pred_check_branch
      %127 = sbr.rel (0) target = $region69
    $region68: #{tcn_forward.1} parent=1 // pred_region
      _
    $region69: #{tcn_forward.1} parent=1 // pred_fallthru
      _
    // Predicated region
    $region70: #{tcn_forward.1} parent=1 // pred_check
      _
    $region71: #{tcn_forward.1} parent=1 // pred_check_branch
      %129 = sbr.rel (0) target = $region73
    $region72: #{tcn_forward.1} parent=1 // pred_region
      _
    $region73: #{tcn_forward.1} parent=1 // pred_fallthru
      _
    // Predicated region
    $region74: #{tcn_forward.1} parent=1 // pred_check
      _
    $region75: #{tcn_forward.1} parent=1 // pred_check_branch
      %131 = sbr.rel (0) target = $region77
    $region76: #{tcn_forward.1} parent=1 // pred_region
      _
    $region77: #{tcn_forward.1} parent=1 // pred_fallthru
      _
    // Predicated region
    $region78: #{tcn_forward.1} parent=1 // pred_check
      _
    $region79: #{tcn_forward.1} parent=1 // pred_check_branch
      %133 = sbr.rel (0) target = $region81
    $region80: #{tcn_forward.1} parent=1 // pred_region
      %135 = dma.done [#allocation4], 2048
    $region81: #{tcn_forward.1} parent=1 // pred_fallthru
      _
    // Predicated region
    $region82: #{tcn_forward.1} parent=1 // pred_check
      _
    $region83: #{tcn_forward.1} parent=1 // pred_check_branch
      %137 = sbr.rel (0) target = $region85
    $region84: #{tcn_forward.1} parent=1 // pred_region
      %139 = dma.done [#allocation6], 2048
    $region85: #{tcn_forward.1} parent=1 // pred_fallthru
      _
    // Predicated region
    $region86: #{tcn_forward.1} parent=1 // pred_check
      _
    $region87: #{tcn_forward.1} parent=1 // pred_check_branch
      %141 = sbr.rel (0) target = $region89
    $region88: #{tcn_forward.1} parent=1 // pred_region
      %143 = dma.done [#allocation6], 2048
    $region89: #{tcn_forward.1} parent=1 // pred_fallthru
      _
    // Predicated region
    $region90: #{tcn_forward.1} parent=1 // pred_check
      _
    $region91: #{tcn_forward.1} parent=1 // pred_check_branch
      %145 = sbr.rel (0) target = $region93
    $region92: #{tcn_forward.1} parent=1 // pred_region
      %147 = dma.done [#allocation9], 1024
    $region93: #{tcn_forward.1} parent=1 // pred_fallthru
      _
    // Predicated region
    $region94: #{tcn_forward.1} parent=1 // pred_check
      _
    $region95: #{tcn_forward.1} parent=1 // pred_check_branch
      %149 = sbr.rel (0) target = $region97
    $region96: #{tcn_forward.1} parent=1 // pred_region
      %151 = dma.done [#allocation9], 2048
    $region97: #{tcn_forward.1} parent=1 // pred_fallthru
      _
    // Predicated region
    $region98: #{tcn_forward.1} parent=1 // pred_check
      _
    $region99: #{tcn_forward.1} parent=1 // pred_check_branch
      %153 = sbr.rel (0) target = $region101
    $region100: #{tcn_forward.1} parent=1 // pred_region
      %155 = dma.done [#allocation12], 2048
    $region101: #{tcn_forward.1} parent=1 // pred_fallthru
      _
    %v157 = vlaneseq
    %v158 = vshrl.u32 %v157, 7
    %v159 = vadd.s32 %v158, 8
    %v160 = vadd.s32 %v158, 16
    %v161 = vadd.s32 %v158, 24
    %vm162 = vcmp.lt.s32.totalorder %v158, 0
    %v163 = vsub.s32 0, %v158
    %v164 = vsel %vm162, %v163, %v158
    %v165 = vshrl.u32 %v164, 4
    %v166 = vand.u32 %v164, 15
    %v167 = vsub.s32 0, %v166
    %v168 = vsel %vm162, %v167, %v166
    %vm169 = vcmp.lt.s32.totalorder %v159, 0
    %v170 = vsub.s32 0, %v159
    %v171 = vsel %vm169, %v170, %v159
    %v172 = vshrl.u32 %v171, 4
    %v173 = vand.u32 %v171, 15
    %v174 = vsub.s32 0, %v173
    %v175 = vsel %vm169, %v174, %v173
    %vm176 = vcmp.lt.s32.totalorder %v160, 0
    %v177 = vsub.s32 0, %v160
    %v178 = vsel %vm176, %v177, %v160
    %v179 = vshrl.u32 %v178, 4
    %v180 = vand.u32 %v178, 15
    %v181 = vsub.s32 0, %v180
    %v182 = vsel %vm176, %v181, %v180
    %vm183 = vcmp.lt.s32.totalorder %v161, 0
    %v184 = vsub.s32 0, %v161
    %v185 = vsel %vm183, %v184, %v161
    %v186 = vshrl.u32 %v185, 4
    %v187 = vand.u32 %v185, 15
    %v188 = vsub.s32 0, %v187
    %v189 = vsel %vm183, %v188, %v187
    %vm190 = vcmp.ne.s32.totalorder %v168, 0
    %vm191 = vcmp.ne.s32.totalorder %v175, 0
    %vm192 = vcmp.ne.s32.totalorder %v182, 0
    %vm193 = vcmp.ne.s32.totalorder %v189, 0
    %vm194 = vcmp.lt.s32.totalorder %v168, 0
    %vm195 = vcmp.lt.s32.totalorder %v175, 0
    %vm196 = vcmp.lt.s32.totalorder %v182, 0
    %vm197 = vcmp.lt.s32.totalorder %v189, 0
    %vm198 = vmand %vm194, %vm190
    %vm199 = vmand %vm195, %vm191
    %vm200 = vmand %vm196, %vm192
    %vm201 = vmand %vm197, %vm193
    %v202 = vadd.s32 %v168, 16
    %v203 = vadd.s32 %v175, 16
    %v204 = vadd.s32 %v182, 16
    %v205 = vadd.s32 %v189, 16
    %v206 = vsel %vm198, %v202, %v168
    %v207 = vsel %vm199, %v203, %v175
    %v208 = vsel %vm200, %v204, %v182
    %v209 = vsel %vm201, %v205, %v189
    %v210 = vld [vmem:[%s0] sm:$0xff]
    %v211 = vld [vmem:[%s0 + $0x8] sm:$0xff]
    %v212 = vld [vmem:[%s0 + $0x10] sm:$0xff]
    %v213 = vld [vmem:[%s0 + $0x18] sm:$0xff]
    %vm214 = vcmp.ge.s32.totalorder %v206, 1
    %vm215 = vcmp.ge.s32.totalorder %v207, 1
    %vm216 = vcmp.ge.s32.totalorder %v208, 1
    %vm217 = vcmp.ge.s32.totalorder %v209, 1
    %v218 = vsel %vm214, 1, 0
    %v219 = vsel %vm215, 1, 0
    %v220 = vsel %vm216, 1, 0
    %v221 = vsel %vm217, 1, 0
    %v222 = vcvt.s32.f32 %v218
    %v223 = vcvt.s32.f32 %v219
    %v224 = vcvt.s32.f32 %v220
    %v225 = vcvt.s32.f32 %v221
    %v226 = vpack.c.bf16 %v211, %v210
    %v227 = vpack.c.bf16 %v213, %v212
    %v228 = vld [vmem:[%s1] sm:$0x3]
    %v229 = vrot.slane %v210, 7
    %v230 = vrot.slane %v211, 7
    %v231 = vrot.slane %v212, 7
    %v232 = vrot.slane %v213, 7
    %vm233 = vcmp.lt.s32.totalorder %v158, 1
    %v234 = vsel %vm233, %v231, %v232
    %v235 = vsel %vm233, %v230, %v231
    %v236 = vsel %vm233, %v229, %v230
    %v237 = vsel %vm233, %v232, %v229
    %v238 = vmul.f32 %v237, %v222
    %v239 = vmul.f32 %v236, %v223
    %v240 = vmul.f32 %v235, %v224
    %v241 = vmul.f32 %v234, %v225
    %v242 = vpack.c.bf16 %v239, %v238
    %v243 = vpack.c.bf16 %v241, %v240
    %s244 = scalar_lea.vmem %s1, 2
    %v245 = vld [vmem:[%s244] sm:$0x3]
    %vm246 = vcmask 31744
    %v248 = vsel %vm246, %v242, 0
    %v251 = vsel %vm246, %v243, 0
    %vm253 = vcmask 1041408
    %v255 = vsel %vm253, %v245, 0
    %257 = vmatpush.bf16.msra.mxu0 0
    %258 = vmatpush.bf16.msra.mxu0 0
    %259 = vmatpush.bf16.msra.mxu0 0
    %260 = vmatpush.bf16.msra.mxu0 0
    %261 = vmatpush.bf16.msra.mxu0 0
    %262 = vmatpush.bf16.msra.mxu0 0
    %263 = vmatpush.bf16.msra.mxu0 0
    %264 = vmatpush.bf16.msra.mxu0 %v255
    %265 = vmatmul.bf16.gmra.mxu0 %v248
    %v266 = vpop.f32.mrf.mxu0
    %v267 = vadd.f32 0.0, %v266
    %v268 = vpop.f32.mrf.mxu0
    %v269 = vadd.f32 0.0, %v268
    %270 = vmatmul.bf16.gmra.mxu0 %v251
    %v271 = vpop.f32.mrf.mxu0
    %v272 = vadd.f32 0.0, %v271
    %v273 = vpop.f32.mrf.mxu0
    %v274 = vadd.f32 0.0, %v273
    %275 = vdwg.mxu0
    %v277 = vsel %vm246, %v226, 0
    %v280 = vsel %vm246, %v227, 0
    %v283 = vsel %vm253, %v228, 0
    %285 = vmatpush.bf16.msra.mxu0 0
    %286 = vmatpush.bf16.msra.mxu0 0
    %287 = vmatpush.bf16.msra.mxu0 0
    %288 = vmatpush.bf16.msra.mxu0 0
    %289 = vmatpush.bf16.msra.mxu0 0
    %290 = vmatpush.bf16.msra.mxu0 0
    %291 = vmatpush.bf16.msra.mxu0 0
    %292 = vmatpush.bf16.msra.mxu0 %v283
    %293 = vmatmul.bf16.gmra.mxu0 %v277
    %v294 = vpop.f32.mrf.mxu0
    %v295 = vadd.f32 %v267, %v294
    %v296 = vpop.f32.mrf.mxu0
    %v297 = vadd.f32 %v269, %v296
    %298 = vmatmul.bf16.gmra.mxu0 %v280
    %v299 = vpop.f32.mrf.mxu0
    %v300 = vadd.f32 %v272, %v299
    %v301 = vpop.f32.mrf.mxu0
    %v302 = vadd.f32 %v274, %v301
    %303 = vdwg.mxu0
    %v304 = vld [vmem:[%s2] sm:$0x1]
    %v306 = vperm.slane %v304, 0
    %v308 = vadd.f32 %v295, %v306
    %v309 = vadd.f32 %v297, %v306
    %v310 = vadd.f32 %v300, %v306
    %v311 = vadd.f32 %v302, %v306
    %v312 = vmax.f32 %v308, 0.0
    %v313 = vmax.f32 %v309, 0.0
    %v314 = vmax.f32 %v310, 0.0
    %v315 = vmax.f32 %v311, 0.0
    %v316 = vpack.c.bf16 %v313, %v312
    %v317 = vpack.c.bf16 %v315, %v314
    %v318 = vld [vmem:[#allocation3] sm:$0xf]
    %v319 = vld [vmem:[#allocation3 + $0x4] sm:$0xf]
    %v320 = vld [vmem:[#allocation3 + $0x8] sm:$0xf]
    %v321 = vld [vmem:[#allocation3 + $0xc] sm:$0xf]
    %v322 = vld [vmem:[#allocation3 + $0x10] sm:$0xf]
    %v323 = vld [vmem:[#allocation3 + $0x14] sm:$0xf]
    %v324 = vld [vmem:[#allocation3 + $0x18] sm:$0xf]
    %v325 = vld [vmem:[#allocation3 + $0x1c] sm:$0xf]
    %v326 = vld [vmem:[#allocation3 + $0x20] sm:$0xf]
    %v327 = vld [vmem:[#allocation3 + $0x24] sm:$0xf]
    %v328 = vld [vmem:[#allocation3 + $0x28] sm:$0xf]
    %v329 = vld [vmem:[#allocation3 + $0x2c] sm:$0xf]
    %v330 = vld [vmem:[#allocation3 + $0x30] sm:$0xf]
    %v331 = vld [vmem:[#allocation3 + $0x34] sm:$0xf]
    %v332 = vld [vmem:[#allocation3 + $0x38] sm:$0xf]
    %v333 = vld [vmem:[#allocation3 + $0x3c] sm:$0xf]
    %v334 = vrot.slane %v312, 7
    %v335 = vrot.slane %v313, 7
    %v336 = vrot.slane %v314, 7
    %v337 = vrot.slane %v315, 7
    %v338 = vsel %vm233, %v336, %v337
    %v339 = vsel %vm233, %v335, %v336
    %v340 = vsel %vm233, %v334, %v335
    %v341 = vsel %vm233, %v337, %v334
    %v342 = vmul.f32 %v341, %v222
    %v343 = vmul.f32 %v340, %v223
    %v344 = vmul.f32 %v339, %v224
    %v345 = vmul.f32 %v338, %v225
    %v346 = vpack.c.bf16 %v343, %v342
    %v347 = vpack.c.bf16 %v345, %v344
    %s348 = scalar_lea.vmem [#allocation3], 64
    %v349 = vld [vmem:[%s348] sm:$0xf]
    %v350 = vld [vmem:[%s348 + $0x4] sm:$0xf]
    %v351 = vld [vmem:[%s348 + $0x8] sm:$0xf]
    %v352 = vld [vmem:[%s348 + $0xc] sm:$0xf]
    %v353 = vld [vmem:[%s348 + $0x10] sm:$0xf]
    %v354 = vld [vmem:[%s348 + $0x14] sm:$0xf]
    %v355 = vld [vmem:[%s348 + $0x18] sm:$0xf]
    %v356 = vld [vmem:[%s348 + $0x1c] sm:$0xf]
    %v357 = vld [vmem:[%s348 + $0x20] sm:$0xf]
    %v358 = vld [vmem:[%s348 + $0x24] sm:$0xf]
    %v359 = vld [vmem:[%s348 + $0x28] sm:$0xf]
    %v360 = vld [vmem:[%s348 + $0x2c] sm:$0xf]
    %v361 = vld [vmem:[%s348 + $0x30] sm:$0xf]
    %v362 = vld [vmem:[%s348 + $0x34] sm:$0xf]
    %v363 = vld [vmem:[%s348 + $0x38] sm:$0xf]
    %v364 = vld [vmem:[%s348 + $0x3c] sm:$0xf]
    %v381 = vunpack.c.l.b16 %v349
    %v382 = vunpack.c.l.b16 %v350
    %v383 = vunpack.c.l.b16 %v351
    %v384 = vunpack.c.l.b16 %v352
    %v385 = vunpack.c.l.b16 %v353
    %v386 = vunpack.c.l.b16 %v354
    %v387 = vunpack.c.l.b16 %v355
    %v388 = vunpack.c.l.b16 %v356
    %v389 = vunpack.c.l.b16 %v357
    %v390 = vunpack.c.l.b16 %v358
    %v391 = vunpack.c.l.b16 %v359
    %v392 = vunpack.c.l.b16 %v360
    %v393 = vunpack.c.l.b16 %v361
    %v394 = vunpack.c.l.b16 %v362
    %v395 = vunpack.c.l.b16 %v363
    %v396 = vunpack.c.l.b16 %v364
    %v397 = vpack.c.b16 %v382, %v381
    %v398 = vpack.c.b16 %v384, %v383
    %v399 = vpack.c.b16 %v386, %v385
    %v400 = vpack.c.b16 %v388, %v387
    %v401 = vpack.c.b16 %v390, %v389
    %v402 = vpack.c.b16 %v392, %v391
    %v403 = vpack.c.b16 %v394, %v393
    %v404 = vpack.c.b16 %v396, %v395
    %413 = vmatpush.bf16.msra.mxu0 %v404
    %414 = vmatpush.bf16.msra.mxu0 %v403
    %415 = vmatpush.bf16.msra.mxu0 %v402
    %416 = vmatpush.bf16.msra.mxu0 %v401
    %417 = vmatpush.bf16.msra.mxu0 %v400
    %418 = vmatpush.bf16.msra.mxu0 %v399
    %419 = vmatpush.bf16.msra.mxu0 %v398
    %420 = vmatpush.bf16.msra.mxu0 %v397
    %421 = vmatmul.bf16.gmra.mxu0 %v346
    %v422 = vpop.f32.mrf.mxu0
    %v423 = vadd.f32 0.0, %v422
    %v424 = vpop.f32.mrf.mxu0
    %v425 = vadd.f32 0.0, %v424
    %426 = vmatmul.bf16.gmra.mxu0 %v347
    %v427 = vpop.f32.mrf.mxu0
    %v428 = vadd.f32 0.0, %v427
    %v429 = vpop.f32.mrf.mxu0
    %v430 = vadd.f32 0.0, %v429
    %431 = vdwg.mxu0
    %v448 = vunpack.c.l.b16 %v318
    %v449 = vunpack.c.l.b16 %v319
    %v450 = vunpack.c.l.b16 %v320
    %v451 = vunpack.c.l.b16 %v321
    %v452 = vunpack.c.l.b16 %v322
    %v453 = vunpack.c.l.b16 %v323
    %v454 = vunpack.c.l.b16 %v324
    %v455 = vunpack.c.l.b16 %v325
    %v456 = vunpack.c.l.b16 %v326
    %v457 = vunpack.c.l.b16 %v327
    %v458 = vunpack.c.l.b16 %v328
    %v459 = vunpack.c.l.b16 %v329
    %v460 = vunpack.c.l.b16 %v330
    %v461 = vunpack.c.l.b16 %v331
    %v462 = vunpack.c.l.b16 %v332
    %v463 = vunpack.c.l.b16 %v333
    %v464 = vpack.c.b16 %v449, %v448
    %v465 = vpack.c.b16 %v451, %v450
    %v466 = vpack.c.b16 %v453, %v452
    %v467 = vpack.c.b16 %v455, %v454
    %v468 = vpack.c.b16 %v457, %v456
    %v469 = vpack.c.b16 %v459, %v458
    %v470 = vpack.c.b16 %v461, %v460
    %v471 = vpack.c.b16 %v463, %v462
    %480 = vmatpush.bf16.msra.mxu0 %v471
    %481 = vmatpush.bf16.msra.mxu0 %v470
    %482 = vmatpush.bf16.msra.mxu0 %v469
    %483 = vmatpush.bf16.msra.mxu0 %v468
    %484 = vmatpush.bf16.msra.mxu0 %v467
    %485 = vmatpush.bf16.msra.mxu0 %v466
    %486 = vmatpush.bf16.msra.mxu0 %v465
    %487 = vmatpush.bf16.msra.mxu0 %v464
    %488 = vmatmul.bf16.gmra.mxu0 %v316
    %v489 = vpop.f32.mrf.mxu0
    %v490 = vadd.f32 %v423, %v489
    %v491 = vpop.f32.mrf.mxu0
    %v492 = vadd.f32 %v425, %v491
    %493 = vmatmul.bf16.gmra.mxu0 %v317
    %v494 = vpop.f32.mrf.mxu0
    %v495 = vadd.f32 %v428, %v494
    %v496 = vpop.f32.mrf.mxu0
    %v497 = vadd.f32 %v430, %v496
    %498 = vdwg.mxu0
    %v499 = vld [vmem:[%s4] sm:$0x1]
    %v501 = vperm.slane %v499, 0
    %v503 = vadd.f32 %v490, %v501
    %v504 = vadd.f32 %v492, %v501
    %v505 = vadd.f32 %v495, %v501
    %v506 = vadd.f32 %v497, %v501
    %v507 = vmax.f32 %v503, 0.0
    %v508 = vmax.f32 %v504, 0.0
    %v509 = vmax.f32 %v505, 0.0
    %v510 = vmax.f32 %v506, 0.0
    %v511 = vld [vmem:[%s5] sm:$0x3]
    %v512 = vld [vmem:[%s6] sm:$0x1]
    %v514 = vperm.slane %v512, 0
    %v517 = vsel %vm253, %v511, 0
    %519 = vmatpush.bf16.msra.mxu0 0
    %520 = vmatpush.bf16.msra.mxu0 0
    %521 = vmatpush.bf16.msra.mxu0 0
    %522 = vmatpush.bf16.msra.mxu0 0
    %523 = vmatpush.bf16.msra.mxu0 0
    %524 = vmatpush.bf16.msra.mxu0 0
    %525 = vmatpush.bf16.msra.mxu0 0
    %526 = vmatpush.bf16.msra.mxu0 %v517
    %527 = vmatmul.bf16.gmra.mxu0 %v277
    %v528 = vpop.f32.mrf.mxu0
    %v529 = vadd.f32 %v514, %v528
    %v530 = vpop.f32.mrf.mxu0
    %v531 = vadd.f32 %v514, %v530
    %532 = vmatmul.bf16.gmra.mxu0 %v280
    %v533 = vpop.f32.mrf.mxu0
    %v534 = vadd.f32 %v514, %v533
    %v535 = vpop.f32.mrf.mxu0
    %v536 = vadd.f32 %v514, %v535
    %537 = vdwg.mxu0
    %v538 = vadd.f32 %v507, %v529
    %v539 = vadd.f32 %v508, %v531
    %v540 = vadd.f32 %v509, %v534
    %v541 = vadd.f32 %v510, %v536
    %v542 = vmax.f32 %v538, 0.0
    %v543 = vmax.f32 %v539, 0.0
    %v544 = vmax.f32 %v540, 0.0
    %v545 = vmax.f32 %v541, 0.0
    %vm546 = vcmp.ge.s32.totalorder %v206, 2
    %vm547 = vcmp.ge.s32.totalorder %v207, 2
    %vm548 = vcmp.ge.s32.totalorder %v208, 2
    %vm549 = vcmp.ge.s32.totalorder %v209, 2
    %v550 = vsel %vm546, 1, 0
    %v551 = vsel %vm547, 1, 0
    %v552 = vsel %vm548, 1, 0
    %v553 = vsel %vm549, 1, 0
    %v554 = vcvt.s32.f32 %v550
    %v555 = vcvt.s32.f32 %v551
    %v556 = vcvt.s32.f32 %v552
    %v557 = vcvt.s32.f32 %v553
    %v558 = vpack.c.bf16 %v543, %v542
    %v559 = vpack.c.bf16 %v545, %v544
    %v560 = vld [vmem:[#allocation5] sm:$0xf]
    %v561 = vld [vmem:[#allocation5 + $0x4] sm:$0xf]
    %v562 = vld [vmem:[#allocation5 + $0x8] sm:$0xf]
    %v563 = vld [vmem:[#allocation5 + $0xc] sm:$0xf]
    %v564 = vld [vmem:[#allocation5 + $0x10] sm:$0xf]
    %v565 = vld [vmem:[#allocation5 + $0x14] sm:$0xf]
    %v566 = vld [vmem:[#allocation5 + $0x18] sm:$0xf]
    %v567 = vld [vmem:[#allocation5 + $0x1c] sm:$0xf]
    %v568 = vld [vmem:[#allocation5 + $0x20] sm:$0xf]
    %v569 = vld [vmem:[#allocation5 + $0x24] sm:$0xf]
    %v570 = vld [vmem:[#allocation5 + $0x28] sm:$0xf]
    %v571 = vld [vmem:[#allocation5 + $0x2c] sm:$0xf]
    %v572 = vld [vmem:[#allocation5 + $0x30] sm:$0xf]
    %v573 = vld [vmem:[#allocation5 + $0x34] sm:$0xf]
    %v574 = vld [vmem:[#allocation5 + $0x38] sm:$0xf]
    %v575 = vld [vmem:[#allocation5 + $0x3c] sm:$0xf]
    %v576 = vrot.slane %v542, 6
    %v577 = vrot.slane %v543, 6
    %v578 = vrot.slane %v544, 6
    %v579 = vrot.slane %v545, 6
    %vm580 = vcmp.lt.s32.totalorder %v158, 2
    %v581 = vsel %vm580, %v578, %v579
    %v582 = vsel %vm580, %v577, %v578
    %v583 = vsel %vm580, %v576, %v577
    %v584 = vsel %vm580, %v579, %v576
    %v585 = vmul.f32 %v584, %v554
    %v586 = vmul.f32 %v583, %v555
    %v587 = vmul.f32 %v582, %v556
    %v588 = vmul.f32 %v581, %v557
    %v589 = vpack.c.bf16 %v586, %v585
    %v590 = vpack.c.bf16 %v588, %v587
    %s591 = scalar_lea.vmem [#allocation5], 64
    %v592 = vld [vmem:[%s591] sm:$0xf]
    %v593 = vld [vmem:[%s591 + $0x4] sm:$0xf]
    %v594 = vld [vmem:[%s591 + $0x8] sm:$0xf]
    %v595 = vld [vmem:[%s591 + $0xc] sm:$0xf]
    %v596 = vld [vmem:[%s591 + $0x10] sm:$0xf]
    %v597 = vld [vmem:[%s591 + $0x14] sm:$0xf]
    %v598 = vld [vmem:[%s591 + $0x18] sm:$0xf]
    %v599 = vld [vmem:[%s591 + $0x1c] sm:$0xf]
    %v600 = vld [vmem:[%s591 + $0x20] sm:$0xf]
    %v601 = vld [vmem:[%s591 + $0x24] sm:$0xf]
    %v602 = vld [vmem:[%s591 + $0x28] sm:$0xf]
    %v603 = vld [vmem:[%s591 + $0x2c] sm:$0xf]
    %v604 = vld [vmem:[%s591 + $0x30] sm:$0xf]
    %v605 = vld [vmem:[%s591 + $0x34] sm:$0xf]
    %v606 = vld [vmem:[%s591 + $0x38] sm:$0xf]
    %v607 = vld [vmem:[%s591 + $0x3c] sm:$0xf]
    %v624 = vunpack.c.l.b16 %v592
    %v625 = vunpack.c.l.b16 %v593
    %v626 = vunpack.c.l.b16 %v594
    %v627 = vunpack.c.l.b16 %v595
    %v628 = vunpack.c.l.b16 %v596
    %v629 = vunpack.c.l.b16 %v597
    %v630 = vunpack.c.l.b16 %v598
    %v631 = vunpack.c.l.b16 %v599
    %v632 = vunpack.c.l.b16 %v600
    %v633 = vunpack.c.l.b16 %v601
    %v634 = vunpack.c.l.b16 %v602
    %v635 = vunpack.c.l.b16 %v603
    %v636 = vunpack.c.l.b16 %v604
    %v637 = vunpack.c.l.b16 %v605
    %v638 = vunpack.c.l.b16 %v606
    %v639 = vunpack.c.l.b16 %v607
    %v640 = vpack.c.b16 %v625, %v624
    %v641 = vpack.c.b16 %v627, %v626
    %v642 = vpack.c.b16 %v629, %v628
    %v643 = vpack.c.b16 %v631, %v630
    %v644 = vpack.c.b16 %v633, %v632
    %v645 = vpack.c.b16 %v635, %v634
    %v646 = vpack.c.b16 %v637, %v636
    %v647 = vpack.c.b16 %v639, %v638
    %656 = vmatpush.bf16.msra.mxu0 %v647
    %657 = vmatpush.bf16.msra.mxu0 %v646
    %658 = vmatpush.bf16.msra.mxu0 %v645
    %659 = vmatpush.bf16.msra.mxu0 %v644
    %660 = vmatpush.bf16.msra.mxu0 %v643
    %661 = vmatpush.bf16.msra.mxu0 %v642
    %662 = vmatpush.bf16.msra.mxu0 %v641
    %663 = vmatpush.bf16.msra.mxu0 %v640
    %664 = vmatmul.bf16.gmra.mxu0 %v589
    %v665 = vpop.f32.mrf.mxu0
    %v666 = vadd.f32 0.0, %v665
    %v667 = vpop.f32.mrf.mxu0
    %v668 = vadd.f32 0.0, %v667
    %669 = vmatmul.bf16.gmra.mxu0 %v590
    %v670 = vpop.f32.mrf.mxu0
    %v671 = vadd.f32 0.0, %v670
    %v672 = vpop.f32.mrf.mxu0
    %v673 = vadd.f32 0.0, %v672
    %674 = vdwg.mxu0
    %v691 = vunpack.c.l.b16 %v560
    %v692 = vunpack.c.l.b16 %v561
    %v693 = vunpack.c.l.b16 %v562
    %v694 = vunpack.c.l.b16 %v563
    %v695 = vunpack.c.l.b16 %v564
    %v696 = vunpack.c.l.b16 %v565
    %v697 = vunpack.c.l.b16 %v566
    %v698 = vunpack.c.l.b16 %v567
    %v699 = vunpack.c.l.b16 %v568
    %v700 = vunpack.c.l.b16 %v569
    %v701 = vunpack.c.l.b16 %v570
    %v702 = vunpack.c.l.b16 %v571
    %v703 = vunpack.c.l.b16 %v572
    %v704 = vunpack.c.l.b16 %v573
    %v705 = vunpack.c.l.b16 %v574
    %v706 = vunpack.c.l.b16 %v575
    %v707 = vpack.c.b16 %v692, %v691
    %v708 = vpack.c.b16 %v694, %v693
    %v709 = vpack.c.b16 %v696, %v695
    %v710 = vpack.c.b16 %v698, %v697
    %v711 = vpack.c.b16 %v700, %v699
    %v712 = vpack.c.b16 %v702, %v701
    %v713 = vpack.c.b16 %v704, %v703
    %v714 = vpack.c.b16 %v706, %v705
    %723 = vmatpush.bf16.msra.mxu0 %v714
    %724 = vmatpush.bf16.msra.mxu0 %v713
    %725 = vmatpush.bf16.msra.mxu0 %v712
    %726 = vmatpush.bf16.msra.mxu0 %v711
    %727 = vmatpush.bf16.msra.mxu0 %v710
    %728 = vmatpush.bf16.msra.mxu0 %v709
    %729 = vmatpush.bf16.msra.mxu0 %v708
    %730 = vmatpush.bf16.msra.mxu0 %v707
    %731 = vmatmul.bf16.gmra.mxu0 %v558
    %v732 = vpop.f32.mrf.mxu0
    %v733 = vadd.f32 %v666, %v732
    %v734 = vpop.f32.mrf.mxu0
    %v735 = vadd.f32 %v668, %v734
    %736 = vmatmul.bf16.gmra.mxu0 %v559
    %v737 = vpop.f32.mrf.mxu0
    %v738 = vadd.f32 %v671, %v737
    %v739 = vpop.f32.mrf.mxu0
    %v740 = vadd.f32 %v673, %v739
    %741 = vdwg.mxu0
    %v742 = vld [vmem:[%s8] sm:$0x1]
    %v744 = vperm.slane %v742, 0
    %v746 = vadd.f32 %v733, %v744
    %v747 = vadd.f32 %v735, %v744
    %v748 = vadd.f32 %v738, %v744
    %v749 = vadd.f32 %v740, %v744
    %v750 = vmax.f32 %v746, 0.0
    %v751 = vmax.f32 %v747, 0.0
    %v752 = vmax.f32 %v748, 0.0
    %v753 = vmax.f32 %v749, 0.0
    %v754 = vpack.c.bf16 %v751, %v750
    %v755 = vpack.c.bf16 %v753, %v752
    %v756 = vld [vmem:[#allocation7] sm:$0xf]
    %v757 = vld [vmem:[#allocation7 + $0x4] sm:$0xf]
    %v758 = vld [vmem:[#allocation7 + $0x8] sm:$0xf]
    %v759 = vld [vmem:[#allocation7 + $0xc] sm:$0xf]
    %v760 = vld [vmem:[#allocation7 + $0x10] sm:$0xf]
    %v761 = vld [vmem:[#allocation7 + $0x14] sm:$0xf]
    %v762 = vld [vmem:[#allocation7 + $0x18] sm:$0xf]
    %v763 = vld [vmem:[#allocation7 + $0x1c] sm:$0xf]
    %v764 = vld [vmem:[#allocation7 + $0x20] sm:$0xf]
    %v765 = vld [vmem:[#allocation7 + $0x24] sm:$0xf]
    %v766 = vld [vmem:[#allocation7 + $0x28] sm:$0xf]
    %v767 = vld [vmem:[#allocation7 + $0x2c] sm:$0xf]
    %v768 = vld [vmem:[#allocation7 + $0x30] sm:$0xf]
    %v769 = vld [vmem:[#allocation7 + $0x34] sm:$0xf]
    %v770 = vld [vmem:[#allocation7 + $0x38] sm:$0xf]
    %v771 = vld [vmem:[#allocation7 + $0x3c] sm:$0xf]
    %v772 = vrot.slane %v750, 6
    %v773 = vrot.slane %v751, 6
    %v774 = vrot.slane %v752, 6
    %v775 = vrot.slane %v753, 6
    %v776 = vsel %vm580, %v774, %v775
    %v777 = vsel %vm580, %v773, %v774
    %v778 = vsel %vm580, %v772, %v773
    %v779 = vsel %vm580, %v775, %v772
    %v780 = vmul.f32 %v779, %v554
    %v781 = vmul.f32 %v778, %v555
    %v782 = vmul.f32 %v777, %v556
    %v783 = vmul.f32 %v776, %v557
    %v784 = vpack.c.bf16 %v781, %v780
    %v785 = vpack.c.bf16 %v783, %v782
    %s786 = scalar_lea.vmem [#allocation7], 64
    %v787 = vld [vmem:[%s786] sm:$0xf]
    %v788 = vld [vmem:[%s786 + $0x4] sm:$0xf]
    %v789 = vld [vmem:[%s786 + $0x8] sm:$0xf]
    %v790 = vld [vmem:[%s786 + $0xc] sm:$0xf]
    %v791 = vld [vmem:[%s786 + $0x10] sm:$0xf]
    %v792 = vld [vmem:[%s786 + $0x14] sm:$0xf]
    %v793 = vld [vmem:[%s786 + $0x18] sm:$0xf]
    %v794 = vld [vmem:[%s786 + $0x1c] sm:$0xf]
    %v795 = vld [vmem:[%s786 + $0x20] sm:$0xf]
    %v796 = vld [vmem:[%s786 + $0x24] sm:$0xf]
    %v797 = vld [vmem:[%s786 + $0x28] sm:$0xf]
    %v798 = vld [vmem:[%s786 + $0x2c] sm:$0xf]
    %v799 = vld [vmem:[%s786 + $0x30] sm:$0xf]
    %v800 = vld [vmem:[%s786 + $0x34] sm:$0xf]
    %v801 = vld [vmem:[%s786 + $0x38] sm:$0xf]
    %v802 = vld [vmem:[%s786 + $0x3c] sm:$0xf]
    %v819 = vunpack.c.l.b16 %v787
    %v820 = vunpack.c.l.b16 %v788
    %v821 = vunpack.c.l.b16 %v789
    %v822 = vunpack.c.l.b16 %v790
    %v823 = vunpack.c.l.b16 %v791
    %v824 = vunpack.c.l.b16 %v792
    %v825 = vunpack.c.l.b16 %v793
    %v826 = vunpack.c.l.b16 %v794
    %v827 = vunpack.c.l.b16 %v795
    %v828 = vunpack.c.l.b16 %v796
    %v829 = vunpack.c.l.b16 %v797
    %v830 = vunpack.c.l.b16 %v798
    %v831 = vunpack.c.l.b16 %v799
    %v832 = vunpack.c.l.b16 %v800
    %v833 = vunpack.c.l.b16 %v801
    %v834 = vunpack.c.l.b16 %v802
    %v835 = vpack.c.b16 %v820, %v819
    %v836 = vpack.c.b16 %v822, %v821
    %v837 = vpack.c.b16 %v824, %v823
    %v838 = vpack.c.b16 %v826, %v825
    %v839 = vpack.c.b16 %v828, %v827
    %v840 = vpack.c.b16 %v830, %v829
    %v841 = vpack.c.b16 %v832, %v831
    %v842 = vpack.c.b16 %v834, %v833
    %851 = vmatpush.bf16.msra.mxu0 %v842
    %852 = vmatpush.bf16.msra.mxu0 %v841
    %853 = vmatpush.bf16.msra.mxu0 %v840
    %854 = vmatpush.bf16.msra.mxu0 %v839
    %855 = vmatpush.bf16.msra.mxu0 %v838
    %856 = vmatpush.bf16.msra.mxu0 %v837
    %857 = vmatpush.bf16.msra.mxu0 %v836
    %858 = vmatpush.bf16.msra.mxu0 %v835
    %859 = vmatmul.bf16.gmra.mxu0 %v784
    %v860 = vpop.f32.mrf.mxu0
    %v861 = vadd.f32 0.0, %v860
    %v862 = vpop.f32.mrf.mxu0
    %v863 = vadd.f32 0.0, %v862
    %864 = vmatmul.bf16.gmra.mxu0 %v785
    %v865 = vpop.f32.mrf.mxu0
    %v866 = vadd.f32 0.0, %v865
    %v867 = vpop.f32.mrf.mxu0
    %v868 = vadd.f32 0.0, %v867
    %869 = vdwg.mxu0
    %v886 = vunpack.c.l.b16 %v756
    %v887 = vunpack.c.l.b16 %v757
    %v888 = vunpack.c.l.b16 %v758
    %v889 = vunpack.c.l.b16 %v759
    %v890 = vunpack.c.l.b16 %v760
    %v891 = vunpack.c.l.b16 %v761
    %v892 = vunpack.c.l.b16 %v762
    %v893 = vunpack.c.l.b16 %v763
    %v894 = vunpack.c.l.b16 %v764
    %v895 = vunpack.c.l.b16 %v765
    %v896 = vunpack.c.l.b16 %v766
    %v897 = vunpack.c.l.b16 %v767
    %v898 = vunpack.c.l.b16 %v768
    %v899 = vunpack.c.l.b16 %v769
    %v900 = vunpack.c.l.b16 %v770
    %v901 = vunpack.c.l.b16 %v771
    %v902 = vpack.c.b16 %v887, %v886
    %v903 = vpack.c.b16 %v889, %v888
    %v904 = vpack.c.b16 %v891, %v890
    %v905 = vpack.c.b16 %v893, %v892
    %v906 = vpack.c.b16 %v895, %v894
    %v907 = vpack.c.b16 %v897, %v896
    %v908 = vpack.c.b16 %v899, %v898
    %v909 = vpack.c.b16 %v901, %v900
    %918 = vmatpush.bf16.msra.mxu0 %v909
    %919 = vmatpush.bf16.msra.mxu0 %v908
    %920 = vmatpush.bf16.msra.mxu0 %v907
    %921 = vmatpush.bf16.msra.mxu0 %v906
    %922 = vmatpush.bf16.msra.mxu0 %v905
    %923 = vmatpush.bf16.msra.mxu0 %v904
    %924 = vmatpush.bf16.msra.mxu0 %v903
    %925 = vmatpush.bf16.msra.mxu0 %v902
    %926 = vmatmul.bf16.gmra.mxu0 %v754
    %v927 = vpop.f32.mrf.mxu0
    %v928 = vadd.f32 %v861, %v927
    %v929 = vpop.f32.mrf.mxu0
    %v930 = vadd.f32 %v863, %v929
    %931 = vmatmul.bf16.gmra.mxu0 %v755
    %v932 = vpop.f32.mrf.mxu0
    %v933 = vadd.f32 %v866, %v932
    %v934 = vpop.f32.mrf.mxu0
    %v935 = vadd.f32 %v868, %v934
    %936 = vdwg.mxu0
    %v937 = vld [vmem:[%s10] sm:$0x1]
    %v939 = vperm.slane %v937, 0
    %v941 = vadd.f32 %v928, %v939
    %v942 = vadd.f32 %v930, %v939
    %v943 = vadd.f32 %v933, %v939
    %v944 = vadd.f32 %v935, %v939
    %v945 = vmax.f32 %v941, 0.0
    %v946 = vmax.f32 %v942, 0.0
    %v947 = vmax.f32 %v943, 0.0
    %v948 = vmax.f32 %v944, 0.0
    %v949 = vld [vmem:[#allocation8] sm:$0xf]
    %v950 = vld [vmem:[#allocation8 + $0x4] sm:$0xf]
    %v951 = vld [vmem:[#allocation8 + $0x8] sm:$0xf]
    %v952 = vld [vmem:[#allocation8 + $0xc] sm:$0xf]
    %v953 = vld [vmem:[#allocation8 + $0x10] sm:$0xf]
    %v954 = vld [vmem:[#allocation8 + $0x14] sm:$0xf]
    %v955 = vld [vmem:[#allocation8 + $0x18] sm:$0xf]
    %v956 = vld [vmem:[#allocation8 + $0x1c] sm:$0xf]
    %v957 = vld [vmem:[#allocation8 + $0x20] sm:$0xf]
    %v958 = vld [vmem:[#allocation8 + $0x24] sm:$0xf]
    %v959 = vld [vmem:[#allocation8 + $0x28] sm:$0xf]
    %v960 = vld [vmem:[#allocation8 + $0x2c] sm:$0xf]
    %v961 = vld [vmem:[#allocation8 + $0x30] sm:$0xf]
    %v962 = vld [vmem:[#allocation8 + $0x34] sm:$0xf]
    %v963 = vld [vmem:[#allocation8 + $0x38] sm:$0xf]
    %v964 = vld [vmem:[#allocation8 + $0x3c] sm:$0xf]
    %v965 = vld [vmem:[%s12] sm:$0x1]
    %v967 = vperm.slane %v965, 0
    %v985 = vunpack.c.l.b16 %v949
    %v986 = vunpack.c.l.b16 %v950
    %v987 = vunpack.c.l.b16 %v951
    %v988 = vunpack.c.l.b16 %v952
    %v989 = vunpack.c.l.b16 %v953
    %v990 = vunpack.c.l.b16 %v954
    %v991 = vunpack.c.l.b16 %v955
    %v992 = vunpack.c.l.b16 %v956
    %v993 = vunpack.c.l.b16 %v957
    %v994 = vunpack.c.l.b16 %v958
    %v995 = vunpack.c.l.b16 %v959
    %v996 = vunpack.c.l.b16 %v960
    %v997 = vunpack.c.l.b16 %v961
    %v998 = vunpack.c.l.b16 %v962
    %v999 = vunpack.c.l.b16 %v963
    %v1000 = vunpack.c.l.b16 %v964
    %v1001 = vpack.c.b16 %v986, %v985
    %v1002 = vpack.c.b16 %v988, %v987
    %v1003 = vpack.c.b16 %v990, %v989
    %v1004 = vpack.c.b16 %v992, %v991
    %v1005 = vpack.c.b16 %v994, %v993
    %v1006 = vpack.c.b16 %v996, %v995
    %v1007 = vpack.c.b16 %v998, %v997
    %v1008 = vpack.c.b16 %v1000, %v999
    %1017 = vmatpush.bf16.msra.mxu0 %v1008
    %1018 = vmatpush.bf16.msra.mxu0 %v1007
    %1019 = vmatpush.bf16.msra.mxu0 %v1006
    %1020 = vmatpush.bf16.msra.mxu0 %v1005
    %1021 = vmatpush.bf16.msra.mxu0 %v1004
    %1022 = vmatpush.bf16.msra.mxu0 %v1003
    %1023 = vmatpush.bf16.msra.mxu0 %v1002
    %1024 = vmatpush.bf16.msra.mxu0 %v1001
    %1025 = vmatmul.bf16.gmra.mxu0 %v558
    %v1026 = vpop.f32.mrf.mxu0
    %v1027 = vadd.f32 %v967, %v1026
    %v1028 = vpop.f32.mrf.mxu0
    %v1029 = vadd.f32 %v967, %v1028
    %1030 = vmatmul.bf16.gmra.mxu0 %v559
    %v1031 = vpop.f32.mrf.mxu0
    %v1032 = vadd.f32 %v967, %v1031
    %v1033 = vpop.f32.mrf.mxu0
    %v1034 = vadd.f32 %v967, %v1033
    %1035 = vdwg.mxu0
    %v1036 = vadd.f32 %v945, %v1027
    %v1037 = vadd.f32 %v946, %v1029
    %v1038 = vadd.f32 %v947, %v1032
    %v1039 = vadd.f32 %v948, %v1034
    %v1040 = vmax.f32 %v1036, 0.0
    %v1041 = vmax.f32 %v1037, 0.0
    %v1042 = vmax.f32 %v1038, 0.0
    %v1043 = vmax.f32 %v1039, 0.0
    %vm1044 = vcmp.ge.s32.totalorder %v206, 4
    %vm1045 = vcmp.ge.s32.totalorder %v207, 4
    %vm1046 = vcmp.ge.s32.totalorder %v208, 4
    %vm1047 = vcmp.ge.s32.totalorder %v209, 4
    %v1048 = vsel %vm1044, 1, 0
    %v1049 = vsel %vm1045, 1, 0
    %v1050 = vsel %vm1046, 1, 0
    %v1051 = vsel %vm1047, 1, 0
    %v1052 = vcvt.s32.f32 %v1048
    %v1053 = vcvt.s32.f32 %v1049
    %v1054 = vcvt.s32.f32 %v1050
    %v1055 = vcvt.s32.f32 %v1051
    %v1056 = vpack.c.bf16 %v1041, %v1040
    %v1057 = vpack.c.bf16 %v1043, %v1042
    %v1058 = vld [vmem:[#allocation10] sm:$0xf]
    %v1059 = vld [vmem:[#allocation10 + $0x4] sm:$0xf]
    %v1060 = vld [vmem:[#allocation10 + $0x8] sm:$0xf]
    %v1061 = vld [vmem:[#allocation10 + $0xc] sm:$0xf]
    %v1062 = vld [vmem:[#allocation10 + $0x10] sm:$0xf]
    %v1063 = vld [vmem:[#allocation10 + $0x14] sm:$0xf]
    %v1064 = vld [vmem:[#allocation10 + $0x18] sm:$0xf]
    %v1065 = vld [vmem:[#allocation10 + $0x1c] sm:$0xf]
    %v1066 = vld [vmem:[#allocation10 + $0x20] sm:$0xf]
    %v1067 = vld [vmem:[#allocation10 + $0x24] sm:$0xf]
    %v1068 = vld [vmem:[#allocation10 + $0x28] sm:$0xf]
    %v1069 = vld [vmem:[#allocation10 + $0x2c] sm:$0xf]
    %v1070 = vld [vmem:[#allocation10 + $0x30] sm:$0xf]
    %v1071 = vld [vmem:[#allocation10 + $0x34] sm:$0xf]
    %v1072 = vld [vmem:[#allocation10 + $0x38] sm:$0xf]
    %v1073 = vld [vmem:[#allocation10 + $0x3c] sm:$0xf]
    %v1074 = vrot.slane %v1040, 4
    %v1075 = vrot.slane %v1041, 4
    %v1076 = vrot.slane %v1042, 4
    %v1077 = vrot.slane %v1043, 4
    %vm1078 = vcmp.lt.s32.totalorder %v158, 4
    %v1079 = vsel %vm1078, %v1076, %v1077
    %v1080 = vsel %vm1078, %v1075, %v1076
    %v1081 = vsel %vm1078, %v1074, %v1075
    %v1082 = vsel %vm1078, %v1077, %v1074
    %v1083 = vmul.f32 %v1082, %v1052
    %v1084 = vmul.f32 %v1081, %v1053
    %v1085 = vmul.f32 %v1080, %v1054
    %v1086 = vmul.f32 %v1079, %v1055
    %v1087 = vpack.c.bf16 %v1084, %v1083
    %v1088 = vpack.c.bf16 %v1086, %v1085
    %s1089 = scalar_lea.vmem [#allocation10], 64
    %v1090 = vld [vmem:[%s1089] sm:$0xf]
    %v1091 = vld [vmem:[%s1089 + $0x4] sm:$0xf]
    %v1092 = vld [vmem:[%s1089 + $0x8] sm:$0xf]
    %v1093 = vld [vmem:[%s1089 + $0xc] sm:$0xf]
    %v1094 = vld [vmem:[%s1089 + $0x10] sm:$0xf]
    %v1095 = vld [vmem:[%s1089 + $0x14] sm:$0xf]
    %v1096 = vld [vmem:[%s1089 + $0x18] sm:$0xf]
    %v1097 = vld [vmem:[%s1089 + $0x1c] sm:$0xf]
    %v1098 = vld [vmem:[%s1089 + $0x20] sm:$0xf]
    %v1099 = vld [vmem:[%s1089 + $0x24] sm:$0xf]
    %v1100 = vld [vmem:[%s1089 + $0x28] sm:$0xf]
    %v1101 = vld [vmem:[%s1089 + $0x2c] sm:$0xf]
    %v1102 = vld [vmem:[%s1089 + $0x30] sm:$0xf]
    %v1103 = vld [vmem:[%s1089 + $0x34] sm:$0xf]
    %v1104 = vld [vmem:[%s1089 + $0x38] sm:$0xf]
    %v1105 = vld [vmem:[%s1089 + $0x3c] sm:$0xf]
    %v1122 = vunpack.c.l.b16 %v1090
    %v1123 = vunpack.c.l.b16 %v1091
    %v1124 = vunpack.c.l.b16 %v1092
    %v1125 = vunpack.c.l.b16 %v1093
    %v1126 = vunpack.c.l.b16 %v1094
    %v1127 = vunpack.c.l.b16 %v1095
    %v1128 = vunpack.c.l.b16 %v1096
    %v1129 = vunpack.c.l.b16 %v1097
    %v1130 = vunpack.c.l.b16 %v1098
    %v1131 = vunpack.c.l.b16 %v1099
    %v1132 = vunpack.c.l.b16 %v1100
    %v1133 = vunpack.c.l.b16 %v1101
    %v1134 = vunpack.c.l.b16 %v1102
    %v1135 = vunpack.c.l.b16 %v1103
    %v1136 = vunpack.c.l.b16 %v1104
    %v1137 = vunpack.c.l.b16 %v1105
    %v1138 = vpack.c.b16 %v1123, %v1122
    %v1139 = vpack.c.b16 %v1125, %v1124
    %v1140 = vpack.c.b16 %v1127, %v1126
    %v1141 = vpack.c.b16 %v1129, %v1128
    %v1142 = vpack.c.b16 %v1131, %v1130
    %v1143 = vpack.c.b16 %v1133, %v1132
    %v1144 = vpack.c.b16 %v1135, %v1134
    %v1145 = vpack.c.b16 %v1137, %v1136
    %1154 = vmatpush.bf16.msra.mxu0 %v1145
    %1155 = vmatpush.bf16.msra.mxu0 %v1144
    %1156 = vmatpush.bf16.msra.mxu0 %v1143
    %1157 = vmatpush.bf16.msra.mxu0 %v1142
    %1158 = vmatpush.bf16.msra.mxu0 %v1141
    %1159 = vmatpush.bf16.msra.mxu0 %v1140
    %1160 = vmatpush.bf16.msra.mxu0 %v1139
    %1161 = vmatpush.bf16.msra.mxu0 %v1138
    %1162 = vmatmul.bf16.gmra.mxu0 %v1087
    %v1163 = vpop.f32.mrf.mxu0
    %v1164 = vadd.f32 0.0, %v1163
    %v1165 = vpop.f32.mrf.mxu0
    %v1166 = vadd.f32 0.0, %v1165
    %1167 = vmatmul.bf16.gmra.mxu0 %v1088
    %v1168 = vpop.f32.mrf.mxu0
    %v1169 = vadd.f32 0.0, %v1168
    %v1170 = vpop.f32.mrf.mxu0
    %v1171 = vadd.f32 0.0, %v1170
    %1172 = vdwg.mxu0
    %v1189 = vunpack.c.l.b16 %v1058
    %v1190 = vunpack.c.l.b16 %v1059
    %v1191 = vunpack.c.l.b16 %v1060
    %v1192 = vunpack.c.l.b16 %v1061
    %v1193 = vunpack.c.l.b16 %v1062
    %v1194 = vunpack.c.l.b16 %v1063
    %v1195 = vunpack.c.l.b16 %v1064
    %v1196 = vunpack.c.l.b16 %v1065
    %v1197 = vunpack.c.l.b16 %v1066
    %v1198 = vunpack.c.l.b16 %v1067
    %v1199 = vunpack.c.l.b16 %v1068
    %v1200 = vunpack.c.l.b16 %v1069
    %v1201 = vunpack.c.l.b16 %v1070
    %v1202 = vunpack.c.l.b16 %v1071
    %v1203 = vunpack.c.l.b16 %v1072
    %v1204 = vunpack.c.l.b16 %v1073
    %v1205 = vpack.c.b16 %v1190, %v1189
    %v1206 = vpack.c.b16 %v1192, %v1191
    %v1207 = vpack.c.b16 %v1194, %v1193
    %v1208 = vpack.c.b16 %v1196, %v1195
    %v1209 = vpack.c.b16 %v1198, %v1197
    %v1210 = vpack.c.b16 %v1200, %v1199
    %v1211 = vpack.c.b16 %v1202, %v1201
    %v1212 = vpack.c.b16 %v1204, %v1203
    %1221 = vmatpush.bf16.msra.mxu0 %v1212
    %1222 = vmatpush.bf16.msra.mxu0 %v1211
    %1223 = vmatpush.bf16.msra.mxu0 %v1210
    %1224 = vmatpush.bf16.msra.mxu0 %v1209
    %1225 = vmatpush.bf16.msra.mxu0 %v1208
    %1226 = vmatpush.bf16.msra.mxu0 %v1207
    %1227 = vmatpush.bf16.msra.mxu0 %v1206
    %1228 = vmatpush.bf16.msra.mxu0 %v1205
    %1229 = vmatmul.bf16.gmra.mxu0 %v1056
    %v1230 = vpop.f32.mrf.mxu0
    %v1231 = vadd.f32 %v1164, %v1230
    %v1232 = vpop.f32.mrf.mxu0
    %v1233 = vadd.f32 %v1166, %v1232
    %1234 = vmatmul.bf16.gmra.mxu0 %v1057
    %v1235 = vpop.f32.mrf.mxu0
    %v1236 = vadd.f32 %v1169, %v1235
    %v1237 = vpop.f32.mrf.mxu0
    %v1238 = vadd.f32 %v1171, %v1237
    %1239 = vdwg.mxu0
    %v1240 = vld [vmem:[%s14] sm:$0x1]
    %v1242 = vperm.slane %v1240, 0
    %v1244 = vadd.f32 %v1231, %v1242
    %v1245 = vadd.f32 %v1233, %v1242
    %v1246 = vadd.f32 %v1236, %v1242
    %v1247 = vadd.f32 %v1238, %v1242
    %v1248 = vmax.f32 %v1244, 0.0
    %v1249 = vmax.f32 %v1245, 0.0
    %v1250 = vmax.f32 %v1246, 0.0
    %v1251 = vmax.f32 %v1247, 0.0
    %v1252 = vpack.c.bf16 %v1249, %v1248
    %v1253 = vpack.c.bf16 %v1251, %v1250
    %v1254 = vld [vmem:[#allocation11] sm:$0xf]
    %v1255 = vld [vmem:[#allocation11 + $0x4] sm:$0xf]
    %v1256 = vld [vmem:[#allocation11 + $0x8] sm:$0xf]
    %v1257 = vld [vmem:[#allocation11 + $0xc] sm:$0xf]
    %v1258 = vld [vmem:[#allocation11 + $0x10] sm:$0xf]
    %v1259 = vld [vmem:[#allocation11 + $0x14] sm:$0xf]
    %v1260 = vld [vmem:[#allocation11 + $0x18] sm:$0xf]
    %v1261 = vld [vmem:[#allocation11 + $0x1c] sm:$0xf]
    %v1262 = vld [vmem:[#allocation11 + $0x20] sm:$0xf]
    %v1263 = vld [vmem:[#allocation11 + $0x24] sm:$0xf]
    %v1264 = vld [vmem:[#allocation11 + $0x28] sm:$0xf]
    %v1265 = vld [vmem:[#allocation11 + $0x2c] sm:$0xf]
    %v1266 = vld [vmem:[#allocation11 + $0x30] sm:$0xf]
    %v1267 = vld [vmem:[#allocation11 + $0x34] sm:$0xf]
    %v1268 = vld [vmem:[#allocation11 + $0x38] sm:$0xf]
    %v1269 = vld [vmem:[#allocation11 + $0x3c] sm:$0xf]
    %v1270 = vrot.slane %v1248, 4
    %v1271 = vrot.slane %v1249, 4
    %v1272 = vrot.slane %v1250, 4
    %v1273 = vrot.slane %v1251, 4
    %v1274 = vsel %vm1078, %v1272, %v1273
    %v1275 = vsel %vm1078, %v1271, %v1272
    %v1276 = vsel %vm1078, %v1270, %v1271
    %v1277 = vsel %vm1078, %v1273, %v1270
    %v1278 = vmul.f32 %v1277, %v1052
    %v1279 = vmul.f32 %v1276, %v1053
    %v1280 = vmul.f32 %v1275, %v1054
    %v1281 = vmul.f32 %v1274, %v1055
    %v1282 = vpack.c.bf16 %v1279, %v1278
    %v1283 = vpack.c.bf16 %v1281, %v1280
    %s1284 = scalar_lea.vmem [#allocation11], 64
    %v1285 = vld [vmem:[%s1284] sm:$0xf]
    %v1286 = vld [vmem:[%s1284 + $0x4] sm:$0xf]
    %v1287 = vld [vmem:[%s1284 + $0x8] sm:$0xf]
    %v1288 = vld [vmem:[%s1284 + $0xc] sm:$0xf]
    %v1289 = vld [vmem:[%s1284 + $0x10] sm:$0xf]
    %v1290 = vld [vmem:[%s1284 + $0x14] sm:$0xf]
    %v1291 = vld [vmem:[%s1284 + $0x18] sm:$0xf]
    %v1292 = vld [vmem:[%s1284 + $0x1c] sm:$0xf]
    %v1293 = vld [vmem:[%s1284 + $0x20] sm:$0xf]
    %v1294 = vld [vmem:[%s1284 + $0x24] sm:$0xf]
    %v1295 = vld [vmem:[%s1284 + $0x28] sm:$0xf]
    %v1296 = vld [vmem:[%s1284 + $0x2c] sm:$0xf]
    %v1297 = vld [vmem:[%s1284 + $0x30] sm:$0xf]
    %v1298 = vld [vmem:[%s1284 + $0x34] sm:$0xf]
    %v1299 = vld [vmem:[%s1284 + $0x38] sm:$0xf]
    %v1300 = vld [vmem:[%s1284 + $0x3c] sm:$0xf]
    %v1317 = vunpack.c.l.b16 %v1285
    %v1318 = vunpack.c.l.b16 %v1286
    %v1319 = vunpack.c.l.b16 %v1287
    %v1320 = vunpack.c.l.b16 %v1288
    %v1321 = vunpack.c.l.b16 %v1289
    %v1322 = vunpack.c.l.b16 %v1290
    %v1323 = vunpack.c.l.b16 %v1291
    %v1324 = vunpack.c.l.b16 %v1292
    %v1325 = vunpack.c.l.b16 %v1293
    %v1326 = vunpack.c.l.b16 %v1294
    %v1327 = vunpack.c.l.b16 %v1295
    %v1328 = vunpack.c.l.b16 %v1296
    %v1329 = vunpack.c.l.b16 %v1297
    %v1330 = vunpack.c.l.b16 %v1298
    %v1331 = vunpack.c.l.b16 %v1299
    %v1332 = vunpack.c.l.b16 %v1300
    %v1333 = vpack.c.b16 %v1318, %v1317
    %v1334 = vpack.c.b16 %v1320, %v1319
    %v1335 = vpack.c.b16 %v1322, %v1321
    %v1336 = vpack.c.b16 %v1324, %v1323
    %v1337 = vpack.c.b16 %v1326, %v1325
    %v1338 = vpack.c.b16 %v1328, %v1327
    %v1339 = vpack.c.b16 %v1330, %v1329
    %v1340 = vpack.c.b16 %v1332, %v1331
    %1349 = vmatpush.bf16.msra.mxu0 %v1340
    %1350 = vmatpush.bf16.msra.mxu0 %v1339
    %1351 = vmatpush.bf16.msra.mxu0 %v1338
    %1352 = vmatpush.bf16.msra.mxu0 %v1337
    %1353 = vmatpush.bf16.msra.mxu0 %v1336
    %1354 = vmatpush.bf16.msra.mxu0 %v1335
    %1355 = vmatpush.bf16.msra.mxu0 %v1334
    %1356 = vmatpush.bf16.msra.mxu0 %v1333
    %1357 = vmatmul.bf16.gmra.mxu0 %v1282
    %v1358 = vpop.f32.mrf.mxu0
    %v1359 = vadd.f32 0.0, %v1358
    %v1360 = vpop.f32.mrf.mxu0
    %v1361 = vadd.f32 0.0, %v1360
    %1362 = vmatmul.bf16.gmra.mxu0 %v1283
    %v1363 = vpop.f32.mrf.mxu0
    %v1364 = vadd.f32 0.0, %v1363
    %v1365 = vpop.f32.mrf.mxu0
    %v1366 = vadd.f32 0.0, %v1365
    %1367 = vdwg.mxu0
    %v1384 = vunpack.c.l.b16 %v1254
    %v1385 = vunpack.c.l.b16 %v1255
    %v1386 = vunpack.c.l.b16 %v1256
    %v1387 = vunpack.c.l.b16 %v1257
    %v1388 = vunpack.c.l.b16 %v1258
    %v1389 = vunpack.c.l.b16 %v1259
    %v1390 = vunpack.c.l.b16 %v1260
    %v1391 = vunpack.c.l.b16 %v1261
    %v1392 = vunpack.c.l.b16 %v1262
    %v1393 = vunpack.c.l.b16 %v1263
    %v1394 = vunpack.c.l.b16 %v1264
    %v1395 = vunpack.c.l.b16 %v1265
    %v1396 = vunpack.c.l.b16 %v1266
    %v1397 = vunpack.c.l.b16 %v1267
    %v1398 = vunpack.c.l.b16 %v1268
    %v1399 = vunpack.c.l.b16 %v1269
    %v1400 = vpack.c.b16 %v1385, %v1384
    %v1401 = vpack.c.b16 %v1387, %v1386
    %v1402 = vpack.c.b16 %v1389, %v1388
    %v1403 = vpack.c.b16 %v1391, %v1390
    %v1404 = vpack.c.b16 %v1393, %v1392
    %v1405 = vpack.c.b16 %v1395, %v1394
    %v1406 = vpack.c.b16 %v1397, %v1396
    %v1407 = vpack.c.b16 %v1399, %v1398
    %1416 = vmatpush.bf16.msra.mxu0 %v1407
    %1417 = vmatpush.bf16.msra.mxu0 %v1406
    %1418 = vmatpush.bf16.msra.mxu0 %v1405
    %1419 = vmatpush.bf16.msra.mxu0 %v1404
    %1420 = vmatpush.bf16.msra.mxu0 %v1403
    %1421 = vmatpush.bf16.msra.mxu0 %v1402
    %1422 = vmatpush.bf16.msra.mxu0 %v1401
    %1423 = vmatpush.bf16.msra.mxu0 %v1400
    %1424 = vmatmul.bf16.gmra.mxu0 %v1252
    %v1425 = vpop.f32.mrf.mxu0
    %v1426 = vadd.f32 %v1359, %v1425
    %v1427 = vpop.f32.mrf.mxu0
    %v1428 = vadd.f32 %v1361, %v1427
    %1429 = vmatmul.bf16.gmra.mxu0 %v1253
    %v1430 = vpop.f32.mrf.mxu0
    %v1431 = vadd.f32 %v1364, %v1430
    %v1432 = vpop.f32.mrf.mxu0
    %v1433 = vadd.f32 %v1366, %v1432
    %1434 = vdwg.mxu0
    %v1435 = vld [vmem:[%s16] sm:$0x1]
    %v1437 = vperm.slane %v1435, 0
    %v1439 = vadd.f32 %v1426, %v1437
    %v1440 = vadd.f32 %v1428, %v1437
    %v1441 = vadd.f32 %v1431, %v1437
    %v1442 = vadd.f32 %v1433, %v1437
    %v1443 = vmax.f32 %v1439, 0.0
    %v1444 = vmax.f32 %v1440, 0.0
    %v1445 = vmax.f32 %v1441, 0.0
    %v1446 = vmax.f32 %v1442, 0.0
    %v1447 = vadd.f32 %v1443, %v1040
    %v1448 = vadd.f32 %v1444, %v1041
    %v1449 = vadd.f32 %v1445, %v1042
    %v1450 = vadd.f32 %v1446, %v1043
    %v1451 = vmax.f32 %v1447, 0.0
    %v1452 = vmax.f32 %v1448, 0.0
    %v1453 = vmax.f32 %v1449, 0.0
    %v1454 = vmax.f32 %v1450, 0.0
    %1455 = vst [vmem:[#allocation2] sm:$0xff] %v1451
    %1456 = vst [vmem:[#allocation2 + $0x8] sm:$0xff] %v1452
    %1457 = vst [vmem:[#allocation2 + $0x10] sm:$0xff] %v1453
    %1458 = vst [vmem:[#allocation2 + $0x18] sm:$0xff] %v1454
    %s1459 = scalar_lea.vmem [#allocation2], 15
    %v1460 = vld [vmem:[%s1459] ss:$16 sm:$0x3]
    %v1461 = vpack.c.bf16 %v1460, %v1460
    %v1462 = vld [vmem:[%s17] sm:$0xf]
    %v1463 = vld [vmem:[%s17 + $0x4] sm:$0xf]
    %v1464 = vld [vmem:[%s17 + $0x8] sm:$0xf]
    %v1465 = vld [vmem:[%s17 + $0xc] sm:$0xf]
    %v1466 = vld [vmem:[%s17 + $0x10] sm:$0xf]
    %v1467 = vld [vmem:[%s17 + $0x14] sm:$0xf]
    %v1468 = vld [vmem:[%s17 + $0x18] sm:$0xf]
    %v1469 = vld [vmem:[%s17 + $0x1c] sm:$0xf]
    %v1470 = vld [vmem:[%s17 + $0x20] sm:$0xf]
    %v1471 = vld [vmem:[%s17 + $0x24] sm:$0xf]
    %v1472 = vld [vmem:[%s17 + $0x28] sm:$0xf]
    %v1473 = vld [vmem:[%s17 + $0x2c] sm:$0xf]
    %v1474 = vld [vmem:[%s17 + $0x30] sm:$0xf]
    %v1475 = vld [vmem:[%s17 + $0x34] sm:$0xf]
    %v1476 = vld [vmem:[%s17 + $0x38] sm:$0xf]
    %v1477 = vld [vmem:[%s17 + $0x3c] sm:$0xf]
    %v1478 = vld [vmem:[%s18] sm:$0x1]
    %v1480 = vperm.slane %v1478, 0
    %v1498 = vunpack.c.l.b16 %v1462
    %v1499 = vunpack.c.l.b16 %v1463
    %v1500 = vunpack.c.l.b16 %v1464
    %v1501 = vunpack.c.l.b16 %v1465
    %v1502 = vunpack.c.l.b16 %v1466
    %v1503 = vunpack.c.l.b16 %v1467
    %v1504 = vunpack.c.l.b16 %v1468
    %v1505 = vunpack.c.l.b16 %v1469
    %v1506 = vunpack.c.l.b16 %v1470
    %v1507 = vunpack.c.l.b16 %v1471
    %v1508 = vunpack.c.l.b16 %v1472
    %v1509 = vunpack.c.l.b16 %v1473
    %v1510 = vunpack.c.l.b16 %v1474
    %v1511 = vunpack.c.l.b16 %v1475
    %v1512 = vunpack.c.l.b16 %v1476
    %v1513 = vunpack.c.l.b16 %v1477
    %v1514 = vpack.c.b16 %v1499, %v1498
    %v1515 = vpack.c.b16 %v1501, %v1500
    %v1516 = vpack.c.b16 %v1503, %v1502
    %v1517 = vpack.c.b16 %v1505, %v1504
    %v1518 = vpack.c.b16 %v1507, %v1506
    %v1519 = vpack.c.b16 %v1509, %v1508
    %v1520 = vpack.c.b16 %v1511, %v1510
    %v1521 = vpack.c.b16 %v1513, %v1512
    %1530 = vmatpush.bf16.msra.mxu0 %v1521
    %1531 = vmatpush.bf16.msra.mxu0 %v1520
    %1532 = vmatpush.bf16.msra.mxu0 %v1519
    %1533 = vmatpush.bf16.msra.mxu0 %v1518
    %1534 = vmatpush.bf16.msra.mxu0 %v1517
    %1535 = vmatpush.bf16.msra.mxu0 %v1516
    %1536 = vmatpush.bf16.msra.mxu0 %v1515
    %1537 = vmatpush.bf16.msra.mxu0 %v1514
    %1538 = vmatmul.bf16.gmra.mxu0 %v1461
    %v1539 = vpop.f32.mrf.mxu0
    %v1540 = vadd.f32 %v1480, %v1539
    %v1541 = vpop.f32.mrf.mxu0
    %1542 = vdwg.mxu0
    %v1543 = vand.u32 2147483647, %v1540
    %v1544 = vsub.f32 0.0, %v1543
    %v1545 = vmul.f32 %v1544, 1.442695
    %v1546 = vpow.pop %v1545
    %vm1547 = vcmp.ge.f32.partialorder %v1540, 0.0
    %v1548 = vadd.f32 %v1546, 1.0
    %v1549 = vrcp.pop %v1548
    %v1550 = vmul.f32 %v1548, %v1549
    %v1551 = vsub.f32 1.0, %v1550
    %v1552 = vmul.f32 %v1549, %v1551
    %v1553 = vadd.f32 %v1549, %v1552
    %vm1554 = vweird.f32 %v1548
    %vm1555 = vweird.f32 %v1549
    %vm1556 = vmor %vm1554, %vm1555
    %v1557 = vsel %vm1556, %v1549, %v1553
    %v1558 = vand.u32 2147483647, %v1548
    %vm1559 = vcmp.eq.f32.partialorder %v1558, 8.507059e+37
    %v1560 = vand.u32 %v1548, 2147483648
    %v1561 = vor.u32 1.1754944e-38, %v1560
    %v1562 = vsel %vm1559, %v1561, %v1557
    %v1563 = vmul.f32 1.0, %v1562
    %v1564 = vmul.f32 %v1546, %v1562
    %v1565 = vsel %vm1547, %v1563, %v1564
    %v1567 = vrot.slane %v1565, 1
    %1569 = vst [vmem:[%s19] sm:$0x1] %v1565
    %1570 = vst [vmem:[%s19 + $0x1] sm:$0x1] %v1567
    // Predicated region
    $region102: #{tcn_forward.1} parent=1 // pred_check
      _
    $region103: #{tcn_forward.1} parent=1 // pred_check_branch
      %1572 = sbr.rel (0) target = $region105
    $region104: #{tcn_forward.1} parent=1 // pred_region
      _
    $region105: #{tcn_forward.1} parent=1 // pred_fallthru
      _
    // Predicated region
    $region106: #{tcn_forward.1} parent=1 // pred_check
      _
    $region107: #{tcn_forward.1} parent=1 // pred_check_branch
      %1574 = sbr.rel (0) target = $region109
    $region108: #{tcn_forward.1} parent=1 // pred_region
      _
    $region109: #{tcn_forward.1} parent=1 // pred_fallthru
      _
    %1575 = vsyncpa [#allocation4], 1
    %1576 = vsyncpa [#allocation6], 1
    %1577 = vsyncpa [#allocation9], 1
    %1578 = vsyncpa [#allocation12], 1

</llo_original>
